<compile_context>
chip_gen: v7x
topology: tpu7x:2x2x1
jax: 0.10.0
libtpu: 0.0.40
codegen_flags: <defaults>
</compile_context>

<pallas_src>
import functools

import numpy as np
import jax
import jax.numpy as jnp
from jax.experimental import pallas as pl
from jax.experimental.pallas import tpu as pltpu

# bf16 weights by default: safe on v5e/v6e/v7x MXU, halves weight HBM/VMEM traffic.
MATMUL_WEIGHT_DTYPE = jnp.bfloat16


# ----------------------------- fused kernel ----------------------------------

def decoder_kernel(z_ref, fcw_ref, fcb_ref, a1_ref,
                   wc_ref, cb_ref, a2_ref,
                   wh_ref, bh_ref,
                   h_ref, mv_ref, *, cout, ohw, eps):
    f32 = jnp.float32
    a1 = a1_ref[0, 0]                         # PReLU slopes, scalars from SMEM
    a2 = a2_ref[0, 0]

    # ---- Stage 1: ConvTransposeBlock.fc + PReLU -----------------------------
    x = jnp.dot(z_ref[...].astype(fcw_ref.dtype), fcw_ref[...],
                preferred_element_type=f32)
    x = x + fcb_ref[...]
    x = jnp.where(x >= 0.0, x, a1 * x)

    # ---- Stage 2: ConvTranspose2d as one dense, lane-dense matmul -----------
    # Output columns are already in NCHW-flatten order: col = c*OH*OW + oy*OW + ox.
    y = jnp.dot(x.astype(wc_ref.dtype), wc_ref[...], preferred_element_type=f32)
    y = y + cb_ref[...]                       # per-channel conv bias (pre-broadcast)

    # ---- Stage 3: BatchNorm2d(affine=False), train-mode batch stats, + PReLU -
    # One pass: sum and sum-of-squares are independent reductions (overlap on XLU).
    # Each channel is a contiguous, 128-aligned block of `ohw` columns.
    b = y.shape[0]
    n = float(b * ohw)
    h_parts = []
    for c in range(cout):                     # cout is small & static -> unrolled
        lo, hi = c * ohw, (c + 1) * ohw
        yc = y[:, lo:hi]
        s = jnp.sum(yc)
        sq = jnp.sum(yc * yc)
        mean = s / n
        var = sq / n - mean * mean            # biased variance (BN train mode)
        yn = (yc - mean) * jax.lax.rsqrt(var + eps)
        h_parts.append(jnp.where(yn >= 0.0, yn, a2 * yn))
    h = jnp.concatenate(h_parts, axis=1)      # (B, cout*ohw), lane-dense
    h_ref[...] = h                            # single unmasked lane-dense store

    # ---- Stage 4: fc_mean / fc_var as ONE matmul, softplus on var half only --
    # wh_ref columns: [mu (padded to HPAD lanes) | var_pre (padded to HPAD lanes)]
    o = jnp.dot(h.astype(wh_ref.dtype), wh_ref[...], preferred_element_type=f32)
    o = o + bh_ref[...]
    half = o.shape[1] // 2                    # static, multiple of 128
    mu = o[:, :half]
    vp = o[:, half:]
    sp = jnp.maximum(vp, 0.0) + jnp.log1p(jnp.exp(-jnp.abs(vp)))   # stable softplus
    mv_ref[:, :half] = mu                     # lane-aligned, unmasked stores
    mv_ref[:, half:] = sp + 1e-8


# ----------------------------- wrapper ----------------------------------------

def decoder_block_forward(z, prep, *, out_channels, out_spatial, out_latent,
                          head_pad):
    B = z.shape[0]
    OH, OW = out_spatial
    ohw = OH * OW
    cohw = out_channels * ohw
    L = out_latent
    hpad = head_pad

    kern = functools.partial(decoder_kernel, cout=out_channels, ohw=ohw, eps=1e-5)

    kin = z.shape[1]
    n1 = prep["fc_w"].shape[1]
    flops = 2 * B * (kin * n1 + n1 * cohw + cohw * 2 * hpad)
    transcendentals = 2 * B * hpad
    bytes_accessed = (sum(int(v.size) * v.dtype.itemsize for v in prep.values())
                      + int(z.size) * z.dtype.itemsize
                      + B * cohw * 4 + B * 2 * hpad * 4)

    vmem = pl.BlockSpec(memory_space=pltpu.MemorySpace.VMEM)
    smem = pl.BlockSpec(memory_space=pltpu.MemorySpace.SMEM)

    h_flat, mv = pl.pallas_call(
        kern,
        out_shape=(jax.ShapeDtypeStruct((B, cohw), jnp.float32),
                   jax.ShapeDtypeStruct((B, 2 * hpad), jnp.float32)),
        in_specs=[vmem, vmem, vmem, smem,      # z, fc_w, fc_b, a1
                  vmem, vmem, smem,            # conv_w, conv_b, a2
                  vmem, vmem],                 # heads_w, heads_b
        out_specs=(vmem, vmem),
        cost_estimate=pl.CostEstimate(flops=flops,
                                      transcendentals=transcendentals,
                                      bytes_accessed=bytes_accessed),
    )(z, prep["fc_w"], prep["fc_b"], prep["a1"],
      prep["conv_w"], prep["conv_b"], prep["a2"],
      prep["heads_w"], prep["heads_b"])

    h = h_flat.reshape(B, out_channels, OH, OW)   # free reshape: already NCHW order
    mu = mv[:, :L]
    var = mv[:, hpad:hpad + L]
    return h, mu, var


# ----------------------------- init-time weight preprocessing ------------------

def convtranspose_as_matrix(w, img_size, stride, padding):
    """Dense M with x_flat(NCHW) @ M == ConvTranspose2d(x) flattened NCHW (no bias)."""
    w = np.asarray(w, np.float32)
    cin, cout, kh_, kw_ = w.shape
    H, W = img_size
    OH = (H - 1) * stride - 2 * padding + kh_
    OW = (W - 1) * stride - 2 * padding + kw_
    m = np.zeros((cin, H * W, cout, OH * OW), np.float32)
    for kh in range(kh_):
        for kw in range(kw_):
            for iy in range(H):
                oy = iy * stride - padding + kh
                if oy < 0 or oy >= OH:
                    continue
                for ix in range(W):
                    ox = ix * stride - padding + kw
                    if ox < 0 or ox >= OW:
                        continue
                    m[:, iy * W + ix, :, oy * OW + ox] += w[:, :, kh, kw]
    return m.reshape(cin * H * W, cout * OH * OW), (OH, OW)


def init_raw_params(key, *, in_latent, out_latent, in_channels, out_channels, ks,
                    img_size):
    H, W = img_size
    OH, OW = 2 * H, 2 * W          # implied by fc_mean/fc_var input dim in the module
    k = jax.random.split(key, 8)
    s = 0.05
    return {
        "fc_w": s * jax.random.normal(k[0], (in_latent, in_channels * H * W), jnp.float32),
        "fc_b": s * jax.random.normal(k[1], (1, in_channels * H * W), jnp.float32),
        "a1": jnp.full((1, 1), 0.25, jnp.float32),          # PReLU default init
        "ct_w": s * jax.random.normal(k[2], (in_channels, out_channels, ks, ks), jnp.float32),
        "ct_b": s * jax.random.normal(k[3], (out_channels,), jnp.float32),
        "a2": jnp.full((1, 1), 0.25, jnp.float32),
        "fm_w": s * jax.random.normal(k[4], (out_channels * OH * OW, out_latent), jnp.float32),
        "fm_b": jnp.zeros((1, out_latent), jnp.float32),
        "fv_w": s * jax.random.normal(k[5], (out_channels * OH * OW, out_latent), jnp.float32),
        "fv_b": jnp.zeros((1, out_latent), jnp.float32),
    }


def prepare_params(raw, *, img_size, stride, padding,
                   matmul_dtype=MATMUL_WEIGHT_DTYPE):
    """Hoisted weight preprocessing (runs once, outside the forward path)."""
    conv_w, (OH, OW) = convtranspose_as_matrix(raw["ct_w"], img_size, stride, padding)
    ohw = OH * OW
    conv_b = np.repeat(np.asarray(raw["ct_b"], np.float32), ohw)[None, :]

    # Heads: [mu | var], each half padded to a 128-lane multiple -> unmasked stores,
    # softplus restricted to the var half, fused into ONE matmul.
    fm_w = np.asarray(raw["fm_w"], np.float32)
    fv_w = np.asarray(raw["fv_w"], np.float32)
    fm_b = np.asarray(raw["fm_b"], np.float32).reshape(-1)
    fv_b = np.asarray(raw["fv_b"], np.float32).reshape(-1)
    K, L = fm_w.shape
    hpad = ((L + 127) // 128) * 128
    heads_w = np.zeros((K, 2 * hpad), np.float32)
    heads_w[:, :L] = fm_w
    heads_w[:, hpad:hpad + L] = fv_w
    heads_b = np.zeros((1, 2 * hpad), np.float32)
    heads_b[0, :L] = fm_b
    heads_b[0, hpad:hpad + L] = fv_b

    prep = {
        "fc_w": jnp.asarray(raw["fc_w"], matmul_dtype),
        "fc_b": jnp.asarray(raw["fc_b"], jnp.float32),
        "a1": jnp.asarray(raw["a1"], jnp.float32),
        "conv_w": jnp.asarray(conv_w, matmul_dtype),
        "conv_b": jnp.asarray(conv_b, jnp.float32),
        "a2": jnp.asarray(raw["a2"], jnp.float32),
        "heads_w": jnp.asarray(heads_w, matmul_dtype),
        "heads_b": jnp.asarray(heads_b, jnp.float32),
    }
    return prep, (OH, OW), hpad


# ----------------------------- main -------------------------------------------

if __name__ == "__main__":
    # ks=4, stride=2, padding=1 doubles the spatial size, matching the
    # out_channels * 2H * 2W input dim of fc_mean / fc_var in the module.
    # B=8 (multiple of 8): fills f32 sublanes / MXU rows, amortizes weight DMA.
    B, in_latent, out_latent = 8, 8, 16
    in_channels, out_channels = 4, 4
    ks, stride, padding = 4, 2, 1
    img_size = (8, 8)

    key = jax.random.PRNGKey(0)
    pkey, zkey = jax.random.split(key)
    raw = init_raw_params(pkey, in_latent=in_latent, out_latent=out_latent,
                          in_channels=in_channels, out_channels=out_channels,
                          ks=ks, img_size=img_size)
    prep, out_spatial, head_pad = prepare_params(raw, img_size=img_size,
                                                 stride=stride, padding=padding)
    z = jax.random.normal(zkey, (B, in_latent), jnp.float32)

    fwd = jax.jit(functools.partial(decoder_block_forward,
                                    out_channels=out_channels,
                                    out_spatial=out_spatial,
                                    out_latent=out_latent,
                                    head_pad=head_pad))
    h, mu, var = fwd(z, prep)
    jax.block_until_ready((h, mu, var))

    assert h.shape == (B, out_channels, 2 * img_size[0], 2 * img_size[1])
    assert mu.shape == (B, out_latent) and var.shape == (B, out_latent)
    assert bool(jnp.all(var > 0.0))
    assert bool(jnp.all(jnp.isfinite(h))) and bool(jnp.all(jnp.isfinite(mu)))
    assert bool(jnp.all(jnp.isfinite(var)))
    print("KERNEL_OK")
</pallas_src>

<mosaic_0001>
module attributes {stable_mosaic.version = 11 : i64} {
  func.func @decoder_kernel(%arg0: memref<8x8xf32, #tpu.memory_space<vmem>>, %arg1: memref<8x256xbf16, #tpu.memory_space<vmem>>, %arg2: memref<1x256xf32, #tpu.memory_space<vmem>>, %arg3: memref<1x1xf32, #tpu.memory_space<smem>>, %arg4: memref<256x1024xbf16, #tpu.memory_space<vmem>>, %arg5: memref<1x1024xf32, #tpu.memory_space<vmem>>, %arg6: memref<1x1xf32, #tpu.memory_space<smem>>, %arg7: memref<1024x256xbf16, #tpu.memory_space<vmem>>, %arg8: memref<1x256xf32, #tpu.memory_space<vmem>>, %arg9: memref<8x1024xf32, #tpu.memory_space<vmem>>, %arg10: memref<8x256xf32, #tpu.memory_space<vmem>>) attributes {dimension_semantics = [], scalar_prefetch = 0 : i64, scratch_operands = 0 : i64, tpu.core_type = #tpu.core_type<tc>} {
    %c0 = arith.constant 0 : index
    %c0_0 = arith.constant 0 : index
    %0 = memref.load %arg3[%c0, %c0_0] : memref<1x1xf32, #tpu.memory_space<smem>>
    %c0_1 = arith.constant 0 : index
    %c0_2 = arith.constant 0 : index
    %1 = memref.load %arg6[%c0_1, %c0_2] : memref<1x1xf32, #tpu.memory_space<smem>>
    %c0_3 = arith.constant 0 : index
    %c0_4 = arith.constant 0 : index
    %2 = vector.load %arg0[%c0_3, %c0_4] : memref<8x8xf32, #tpu.memory_space<vmem>>, vector<8x8xf32>
    %3 = arith.truncf %2 : vector<8x8xf32> to vector<8x8xbf16>
    %c0_5 = arith.constant 0 : index
    %c0_6 = arith.constant 0 : index
    %4 = vector.load %arg1[%c0_5, %c0_6] : memref<8x256xbf16, #tpu.memory_space<vmem>>, vector<8x256xbf16>
    %cst = arith.constant dense<0.000000e+00> : vector<8x256xf32>
    %5 = tpu.matmul %3, %4, %cst {dimension_numbers = #tpu.dot_dimension_numbers<[1], [0], [0], [1], [0, 0, 1, 1], [], []>} : vector<8x8xbf16>, vector<8x256xbf16>, vector<8x256xf32> -> vector<8x256xf32>
    %c0_7 = arith.constant 0 : index
    %c0_8 = arith.constant 0 : index
    %6 = vector.load %arg2[%c0_7, %c0_8] : memref<1x256xf32, #tpu.memory_space<vmem>>, vector<1x256xf32>
    %7 = vector.broadcast %6 : vector<1x256xf32> to vector<8x256xf32>
    %8 = arith.addf %5, %7 : vector<8x256xf32>
    %cst_9 = arith.constant 0.000000e+00 : f32
    %9 = vector.broadcast %cst_9 : f32 to vector<8x256xf32>
    %10 = arith.cmpf oge, %8, %9 : vector<8x256xf32>
    %11 = vector.broadcast %0 : f32 to vector<8x256xf32>
    %12 = arith.mulf %11, %8 : vector<8x256xf32>
    %13 = arith.select %10, %8, %12 : vector<8x256xi1>, vector<8x256xf32>
    %14 = arith.truncf %13 : vector<8x256xf32> to vector<8x256xbf16>
    %c0_10 = arith.constant 0 : index
    %c0_11 = arith.constant 0 : index
    %15 = vector.load %arg4[%c0_10, %c0_11] : memref<256x1024xbf16, #tpu.memory_space<vmem>>, vector<256x1024xbf16>
    %cst_12 = arith.constant dense<0.000000e+00> : vector<8x1024xf32>
    %16 = tpu.matmul %14, %15, %cst_12 {dimension_numbers = #tpu.dot_dimension_numbers<[1], [0], [0], [1], [0, 0, 1, 1], [], []>} : vector<8x256xbf16>, vector<256x1024xbf16>, vector<8x1024xf32> -> vector<8x1024xf32>
    %c0_13 = arith.constant 0 : index
    %c0_14 = arith.constant 0 : index
    %17 = vector.load %arg5[%c0_13, %c0_14] : memref<1x1024xf32, #tpu.memory_space<vmem>>, vector<1x1024xf32>
    %18 = vector.broadcast %17 : vector<1x1024xf32> to vector<8x1024xf32>
    %19 = arith.addf %16, %18 : vector<8x1024xf32>
    %20 = vector.extract_strided_slice %19 {offsets = [0, 0], sizes = [8, 256], strides = [1, 1]} : vector<8x1024xf32> to vector<8x256xf32>
    %21 = vector.shape_cast %20 : vector<8x256xf32> to vector<1x8x256xf32>
    %cst_15 = arith.constant dense<0.000000e+00> : vector<1xf32>
    %22 = vector.multi_reduction <add>, %21, %cst_15 [1, 2] : vector<1x8x256xf32> to vector<1xf32>
    %23 = vector.shape_cast %22 : vector<1xf32> to vector<1x1x1xf32>
    %24 = vector.extract %23[0, 0, 0] : f32 from vector<1x1x1xf32>
    %25 = arith.mulf %20, %20 : vector<8x256xf32>
    %26 = vector.shape_cast %25 : vector<8x256xf32> to vector<1x8x256xf32>
    %cst_16 = arith.constant dense<0.000000e+00> : vector<1xf32>
    %27 = vector.multi_reduction <add>, %26, %cst_16 [1, 2] : vector<1x8x256xf32> to vector<1xf32>
    %28 = vector.shape_cast %27 : vector<1xf32> to vector<1x1x1xf32>
    %29 = vector.extract %28[0, 0, 0] : f32 from vector<1x1x1xf32>
    %cst_17 = arith.constant 2.048000e+03 : f32
    %30 = arith.divf %24, %cst_17 : f32
    %cst_18 = arith.constant 2.048000e+03 : f32
    %31 = arith.divf %29, %cst_18 : f32
    %32 = arith.mulf %30, %30 : f32
    %33 = arith.subf %31, %32 : f32
    %34 = vector.broadcast %30 : f32 to vector<8x256xf32>
    %35 = arith.subf %20, %34 : vector<8x256xf32>
    %cst_19 = arith.constant 9.99999974E-6 : f32
    %36 = arith.addf %33, %cst_19 : f32
    %37 = math.rsqrt %36 : f32
    %38 = vector.broadcast %37 : f32 to vector<8x256xf32>
    %39 = arith.mulf %35, %38 : vector<8x256xf32>
    %cst_20 = arith.constant 0.000000e+00 : f32
    %40 = vector.broadcast %cst_20 : f32 to vector<8x256xf32>
    %41 = arith.cmpf oge, %39, %40 : vector<8x256xf32>
    %42 = vector.broadcast %1 : f32 to vector<8x256xf32>
    %43 = arith.mulf %42, %39 : vector<8x256xf32>
    %44 = arith.select %41, %39, %43 : vector<8x256xi1>, vector<8x256xf32>
    %45 = vector.extract_strided_slice %19 {offsets = [0, 256], sizes = [8, 256], strides = [1, 1]} : vector<8x1024xf32> to vector<8x256xf32>
    %46 = vector.shape_cast %45 : vector<8x256xf32> to vector<1x8x256xf32>
    %cst_21 = arith.constant dense<0.000000e+00> : vector<1xf32>
    %47 = vector.multi_reduction <add>, %46, %cst_21 [1, 2] : vector<1x8x256xf32> to vector<1xf32>
    %48 = vector.shape_cast %47 : vector<1xf32> to vector<1x1x1xf32>
    %49 = vector.extract %48[0, 0, 0] : f32 from vector<1x1x1xf32>
    %50 = arith.mulf %45, %45 : vector<8x256xf32>
    %51 = vector.shape_cast %50 : vector<8x256xf32> to vector<1x8x256xf32>
    %cst_22 = arith.constant dense<0.000000e+00> : vector<1xf32>
    %52 = vector.multi_reduction <add>, %51, %cst_22 [1, 2] : vector<1x8x256xf32> to vector<1xf32>
    %53 = vector.shape_cast %52 : vector<1xf32> to vector<1x1x1xf32>
    %54 = vector.extract %53[0, 0, 0] : f32 from vector<1x1x1xf32>
    %cst_23 = arith.constant 2.048000e+03 : f32
    %55 = arith.divf %49, %cst_23 : f32
    %cst_24 = arith.constant 2.048000e+03 : f32
    %56 = arith.divf %54, %cst_24 : f32
    %57 = arith.mulf %55, %55 : f32
    %58 = arith.subf %56, %57 : f32
    %59 = vector.broadcast %55 : f32 to vector<8x256xf32>
    %60 = arith.subf %45, %59 : vector<8x256xf32>
    %cst_25 = arith.constant 9.99999974E-6 : f32
    %61 = arith.addf %58, %cst_25 : f32
    %62 = math.rsqrt %61 : f32
    %63 = vector.broadcast %62 : f32 to vector<8x256xf32>
    %64 = arith.mulf %60, %63 : vector<8x256xf32>
    %cst_26 = arith.constant 0.000000e+00 : f32
    %65 = vector.broadcast %cst_26 : f32 to vector<8x256xf32>
    %66 = arith.cmpf oge, %64, %65 : vector<8x256xf32>
    %67 = vector.broadcast %1 : f32 to vector<8x256xf32>
    %68 = arith.mulf %67, %64 : vector<8x256xf32>
    %69 = arith.select %66, %64, %68 : vector<8x256xi1>, vector<8x256xf32>
    %70 = vector.extract_strided_slice %19 {offsets = [0, 512], sizes = [8, 256], strides = [1, 1]} : vector<8x1024xf32> to vector<8x256xf32>
    %71 = vector.shape_cast %70 : vector<8x256xf32> to vector<1x8x256xf32>
    %cst_27 = arith.constant dense<0.000000e+00> : vector<1xf32>
    %72 = vector.multi_reduction <add>, %71, %cst_27 [1, 2] : vector<1x8x256xf32> to vector<1xf32>
    %73 = vector.shape_cast %72 : vector<1xf32> to vector<1x1x1xf32>
    %74 = vector.extract %73[0, 0, 0] : f32 from vector<1x1x1xf32>
    %75 = arith.mulf %70, %70 : vector<8x256xf32>
    %76 = vector.shape_cast %75 : vector<8x256xf32> to vector<1x8x256xf32>
    %cst_28 = arith.constant dense<0.000000e+00> : vector<1xf32>
    %77 = vector.multi_reduction <add>, %76, %cst_28 [1, 2] : vector<1x8x256xf32> to vector<1xf32>
    %78 = vector.shape_cast %77 : vector<1xf32> to vector<1x1x1xf32>
    %79 = vector.extract %78[0, 0, 0] : f32 from vector<1x1x1xf32>
    %cst_29 = arith.constant 2.048000e+03 : f32
    %80 = arith.divf %74, %cst_29 : f32
    %cst_30 = arith.constant 2.048000e+03 : f32
    %81 = arith.divf %79, %cst_30 : f32
    %82 = arith.mulf %80, %80 : f32
    %83 = arith.subf %81, %82 : f32
    %84 = vector.broadcast %80 : f32 to vector<8x256xf32>
    %85 = arith.subf %70, %84 : vector<8x256xf32>
    %cst_31 = arith.constant 9.99999974E-6 : f32
    %86 = arith.addf %83, %cst_31 : f32
    %87 = math.rsqrt %86 : f32
    %88 = vector.broadcast %87 : f32 to vector<8x256xf32>
    %89 = arith.mulf %85, %88 : vector<8x256xf32>
    %cst_32 = arith.constant 0.000000e+00 : f32
    %90 = vector.broadcast %cst_32 : f32 to vector<8x256xf32>
    %91 = arith.cmpf oge, %89, %90 : vector<8x256xf32>
    %92 = vector.broadcast %1 : f32 to vector<8x256xf32>
    %93 = arith.mulf %92, %89 : vector<8x256xf32>
    %94 = arith.select %91, %89, %93 : vector<8x256xi1>, vector<8x256xf32>
    %95 = vector.extract_strided_slice %19 {offsets = [0, 768], sizes = [8, 256], strides = [1, 1]} : vector<8x1024xf32> to vector<8x256xf32>
    %96 = vector.shape_cast %95 : vector<8x256xf32> to vector<1x8x256xf32>
    %cst_33 = arith.constant dense<0.000000e+00> : vector<1xf32>
    %97 = vector.multi_reduction <add>, %96, %cst_33 [1, 2] : vector<1x8x256xf32> to vector<1xf32>
    %98 = vector.shape_cast %97 : vector<1xf32> to vector<1x1x1xf32>
    %99 = vector.extract %98[0, 0, 0] : f32 from vector<1x1x1xf32>
    %100 = arith.mulf %95, %95 : vector<8x256xf32>
    %101 = vector.shape_cast %100 : vector<8x256xf32> to vector<1x8x256xf32>
    %cst_34 = arith.constant dense<0.000000e+00> : vector<1xf32>
    %102 = vector.multi_reduction <add>, %101, %cst_34 [1, 2] : vector<1x8x256xf32> to vector<1xf32>
    %103 = vector.shape_cast %102 : vector<1xf32> to vector<1x1x1xf32>
    %104 = vector.extract %103[0, 0, 0] : f32 from vector<1x1x1xf32>
    %cst_35 = arith.constant 2.048000e+03 : f32
    %105 = arith.divf %99, %cst_35 : f32
    %cst_36 = arith.constant 2.048000e+03 : f32
    %106 = arith.divf %104, %cst_36 : f32
    %107 = arith.mulf %105, %105 : f32
    %108 = arith.subf %106, %107 : f32
    %109 = vector.broadcast %105 : f32 to vector<8x256xf32>
    %110 = arith.subf %95, %109 : vector<8x256xf32>
    %cst_37 = arith.constant 9.99999974E-6 : f32
    %111 = arith.addf %108, %cst_37 : f32
    %112 = math.rsqrt %111 : f32
    %113 = vector.broadcast %112 : f32 to vector<8x256xf32>
    %114 = arith.mulf %110, %113 : vector<8x256xf32>
    %cst_38 = arith.constant 0.000000e+00 : f32
    %115 = vector.broadcast %cst_38 : f32 to vector<8x256xf32>
    %116 = arith.cmpf oge, %114, %115 : vector<8x256xf32>
    %117 = vector.broadcast %1 : f32 to vector<8x256xf32>
    %118 = arith.mulf %117, %114 : vector<8x256xf32>
    %119 = arith.select %116, %114, %118 : vector<8x256xi1>, vector<8x256xf32>
    %120 = tpu.concatenate %44, %69, %94, %119 in 1 : vector<8x256xf32>, vector<8x256xf32>, vector<8x256xf32>, vector<8x256xf32> -> vector<8x1024xf32>
    %c0_39 = arith.constant 0 : index
    %c0_40 = arith.constant 0 : index
    %121 = vector.load %arg9[%c0_39, %c0_40] : memref<8x1024xf32, #tpu.memory_space<vmem>>, vector<8x1024xf32>
    tpu.vector_store %arg9[%c0_39, %c0_40], %120 {strides = array<i32>} : memref<8x1024xf32, #tpu.memory_space<vmem>>, vector<8x1024xf32>,
    %122 = arith.truncf %120 : vector<8x1024xf32> to vector<8x1024xbf16>
    %c0_41 = arith.constant 0 : index
    %c0_42 = arith.constant 0 : index
    %123 = vector.load %arg7[%c0_41, %c0_42] : memref<1024x256xbf16, #tpu.memory_space<vmem>>, vector<1024x256xbf16>
    %cst_43 = arith.constant dense<0.000000e+00> : vector<8x256xf32>
    %124 = tpu.matmul %122, %123, %cst_43 {dimension_numbers = #tpu.dot_dimension_numbers<[1], [0], [0], [1], [0, 0, 1, 1], [], []>} : vector<8x1024xbf16>, vector<1024x256xbf16>, vector<8x256xf32> -> vector<8x256xf32>
    %c0_44 = arith.constant 0 : index
    %c0_45 = arith.constant 0 : index
    %125 = vector.load %arg8[%c0_44, %c0_45] : memref<1x256xf32, #tpu.memory_space<vmem>>, vector<1x256xf32>
    %126 = vector.broadcast %125 : vector<1x256xf32> to vector<8x256xf32>
    %127 = arith.addf %124, %126 : vector<8x256xf32>
    %128 = vector.extract_strided_slice %127 {offsets = [0, 0], sizes = [8, 128], strides = [1, 1]} : vector<8x256xf32> to vector<8x128xf32>
    %129 = vector.extract_strided_slice %127 {offsets = [0, 128], sizes = [8, 128], strides = [1, 1]} : vector<8x256xf32> to vector<8x128xf32>
    %cst_46 = arith.constant 0.000000e+00 : f32
    %130 = vector.broadcast %cst_46 : f32 to vector<8x128xf32>
    %131 = arith.maximumf %129, %130 : vector<8x128xf32>
    %132 = math.absf %129 : vector<8x128xf32>
    %cst_47 = arith.constant 0.000000e+00 : f32
    %133 = vector.broadcast %cst_47 : f32 to vector<8x128xf32>
    %134 = arith.subf %133, %132 : vector<8x128xf32>
    %135 = math.exp %134 : vector<8x128xf32>
    %136 = math.log1p %135 : vector<8x128xf32>
    %137 = arith.addf %131, %136 : vector<8x128xf32>
    %c0_48 = arith.constant 0 : index
    %c0_49 = arith.constant 0 : index
    %138 = vector.load %arg10[%c0_48, %c0_49] : memref<8x256xf32, #tpu.memory_space<vmem>>, vector<8x128xf32>
    tpu.vector_store %arg10[%c0_48, %c0_49], %128 {strides = array<i32>} : memref<8x256xf32, #tpu.memory_space<vmem>>, vector<8x128xf32>,
    %cst_50 = arith.constant 9.99999993E-9 : f32
    %139 = vector.broadcast %cst_50 : f32 to vector<8x128xf32>
    %140 = arith.addf %137, %139 : vector<8x128xf32>
    %c0_51 = arith.constant 0 : index
    %c128 = arith.constant 128 : index
    %141 = vector.load %arg10[%c0_51, %c128] : memref<8x256xf32, #tpu.memory_space<vmem>>, vector<8x128xf32>
    tpu.vector_store %arg10[%c0_51, %c128], %140 {strides = array<i32>} : memref<8x256xf32, #tpu.memory_space<vmem>>, vector<8x128xf32>,
    return
  }
}

</mosaic_0001>

<llo_original>
// kernel: decoder_block_forward.1
$region0: #{decoder_block_forward.1}
  #allocation0 [shape = 'u32[]', space=smem, size = 0x4, offset = 0x4, fixed_abs, tag = 'smem constant byte address 0x4 - core index']
  #allocation1 [shape = 'u32[144,128]{1,0:T(1,128)}', space=vmem, size = 0x12000, scoped, tag = 'internal scratch']
  #allocation2 [shape = 'f32[1,1]{1,0:T(1,128)S(6)}', space=smem, size = 0x200, scoped, tag = 'scoped memory for decoder_block_forward.1']
  #allocation3 [shape = 'f32[1,1]{1,0:T(1,128)S(6)}', space=smem, size = 0x200, scoped, tag = 'scoped memory for decoder_block_forward.1']
  %s0 = inlined_call_operand.hbm [shape: f32[8,8], index: 0, kind: input, shape index: {}]
  %s1 = inlined_call_operand.vmem [shape: bf16[8,256], index: 1, kind: input, shape index: {}]
  %s2 = inlined_call_operand.vmem [shape: f32[1,256], index: 2, kind: input, shape index: {}]
  %s3 = inlined_call_operand.<no memory space> [shape: f32[1,1], index: 3, kind: input, shape index: {}]
  %s4 = inlined_call_operand.hbm [shape: bf16[256,1024], index: 4, kind: input, shape index: {}]
  %s5 = inlined_call_operand.hbm [shape: f32[1,1024], index: 5, kind: input, shape index: {}]
  %s6 = inlined_call_operand.<no memory space> [shape: f32[1,1], index: 6, kind: input, shape index: {}]
  %s7 = inlined_call_operand.hbm [shape: bf16[1024,256], index: 7, kind: input, shape index: {}]
  %s8 = inlined_call_operand.vmem [shape: f32[1,256], index: 8, kind: input, shape index: {}]
  %s9 = inlined_call_operand.vmem [shape: f32[8,1024], index: 9, kind: output, shape index: {0}]
  %s10 = inlined_call_operand.vmem [shape: f32[8,256], index: 10, kind: output, shape index: {1}]
  %11 = xla_tuple %s9, %s10
  %s12 = sld [smem:[#allocation0]]
  $region70: #{decoder_block_forward.1} parent=0
    _
  %s14 = ssub.s32 1, %s12
  %s15 = scalar_select 0, %s14, %s12
  %16 = sst [smem:[#allocation2]] %s3
  %17 = sst [smem:[#allocation3]] %s6
  $region1: #{decoder_block_forward.1} parent=0
    #allocation4 [shape = 'u8[4096]{0}', space=vmem, size = 0x1000, scoped, tag = 'input window, operand 0, single buffered']
    #allocation5 [shape = 's32[1]{0}', space=sflag, size = 0x4, scoped, tag = 'scoped memory for decoder_block_forward.1']
    #allocation6 [shape = 'u8[524288]{0}', space=vmem, size = 0x80000, scoped, tag = 'input window, operand 4, single buffered']
    #allocation7 [shape = 's32[1]{0}', space=sflag, size = 0x4, scoped, tag = 'scoped memory for decoder_block_forward.1']
    #allocation8 [shape = 'u8[4096]{0}', space=vmem, size = 0x1000, scoped, tag = 'input window, operand 5, single buffered']
    #allocation9 [shape = 'u8[524288]{0}', space=vmem, size = 0x80000, scoped, tag = 'input window, operand 7, single buffered']
    #allocation10 [shape = 's32[1]{0}', space=sflag, size = 0x4, scoped, tag = 'scoped memory for decoder_block_forward.1']
    %18 = vsyncpa [#allocation5], 0
    %19 = vsyncpa [#allocation7], 0
    %20 = vsyncpa [#allocation10], 0
    // Predicated region
    $region2: #{decoder_block_forward.1} parent=1 // pred_check
      _
    $region3: #{decoder_block_forward.1} parent=1 // pred_check_branch
      %22 = sbr.rel (0) target = $region5
    $region4: #{decoder_block_forward.1} parent=1 // pred_region
      %s24 = ssub.s32 128, 128
      %25 = vsyncadd [#allocation5], %s24
      %s27 = sshll.u32 [#allocation4], 4
      %s28 = int_to_ptr.vmem [resolvable:$true] %s27
      %30 = dma.hbm_to_vmem [thread:$0]  %s0, 128, %s28, [#allocation5]
    $region5: #{decoder_block_forward.1} parent=1 // pred_fallthru
      _
    // Predicated region
    $region6: #{decoder_block_forward.1} parent=1 // pred_check
      _
    $region7: #{decoder_block_forward.1} parent=1 // pred_check_branch
      %32 = sbr.rel (0) target = $region9
    $region8: #{decoder_block_forward.1} parent=1 // pred_region
      _
    $region9: #{decoder_block_forward.1} parent=1 // pred_fallthru
      _
    // Predicated region
    $region10: #{decoder_block_forward.1} parent=1 // pred_check
      _
    $region11: #{decoder_block_forward.1} parent=1 // pred_check_branch
      %34 = sbr.rel (0) target = $region13
    $region12: #{decoder_block_forward.1} parent=1 // pred_region
      _
    $region13: #{decoder_block_forward.1} parent=1 // pred_fallthru
      _
    // Predicated region
    $region14: #{decoder_block_forward.1} parent=1 // pred_check
      _
    $region15: #{decoder_block_forward.1} parent=1 // pred_check_branch
      %36 = sbr.rel (0) target = $region17
    $region16: #{decoder_block_forward.1} parent=1 // pred_region
      _
    $region17: #{decoder_block_forward.1} parent=1 // pred_fallthru
      _
    // Predicated region
    $region18: #{decoder_block_forward.1} parent=1 // pred_check
      _
    $region19: #{decoder_block_forward.1} parent=1 // pred_check_branch
      %38 = sbr.rel (0) target = $region21
    $region20: #{decoder_block_forward.1} parent=1 // pred_region
      %s40 = ssub.s32 16384, 16384
      %41 = vsyncadd [#allocation7], %s40
      %s42 = sshll.u32 [#allocation6], 4
      %s43 = int_to_ptr.vmem [resolvable:$true] %s42
      %48 = dma.hbm_to_vmem [thread:$0]  %s4, 16384, %s43, [#allocation7], 512, 512, 32
    $region21: #{decoder_block_forward.1} parent=1 // pred_fallthru
      _
    // Predicated region
    $region22: #{decoder_block_forward.1} parent=1 // pred_check
      _
    $region23: #{decoder_block_forward.1} parent=1 // pred_check_branch
      %50 = sbr.rel (0) target = $region25
    $region24: #{decoder_block_forward.1} parent=1 // pred_region
      %s52 = ssub.s32 128, 128
      %53 = vsyncadd [#allocation7], %s52
      %s55 = sshll.u32 [#allocation8], 4
      %s56 = int_to_ptr.vmem [resolvable:$true] %s55
      %58 = dma.hbm_to_vmem [thread:$0]  %s5, 128, %s56, [#allocation7]
    $region25: #{decoder_block_forward.1} parent=1 // pred_fallthru
      _
    // Predicated region
    $region26: #{decoder_block_forward.1} parent=1 // pred_check
      _
    $region27: #{decoder_block_forward.1} parent=1 // pred_check_branch
      %60 = sbr.rel (0) target = $region29
    $region28: #{decoder_block_forward.1} parent=1 // pred_region
      _
    $region29: #{decoder_block_forward.1} parent=1 // pred_fallthru
      _
    // Predicated region
    $region30: #{decoder_block_forward.1} parent=1 // pred_check
      _
    $region31: #{decoder_block_forward.1} parent=1 // pred_check_branch
      %62 = sbr.rel (0) target = $region33
    $region32: #{decoder_block_forward.1} parent=1 // pred_region
      %s64 = ssub.s32 16384, 16384
      %65 = vsyncadd [#allocation10], %s64
      %s66 = sshll.u32 [#allocation9], 4
      %s67 = int_to_ptr.vmem [resolvable:$true] %s66
      %72 = dma.hbm_to_vmem [thread:$0]  %s7, 16384, %s67, [#allocation10], 128, 128, 8
    $region33: #{decoder_block_forward.1} parent=1 // pred_fallthru
      _
    // Predicated region
    $region34: #{decoder_block_forward.1} parent=1 // pred_check
      _
    $region35: #{decoder_block_forward.1} parent=1 // pred_check_branch
      %74 = sbr.rel (0) target = $region37
    $region36: #{decoder_block_forward.1} parent=1 // pred_region
      _
    $region37: #{decoder_block_forward.1} parent=1 // pred_fallthru
      _
    // Predicated region
    $region38: #{decoder_block_forward.1} parent=1 // pred_check
      _
    $region39: #{decoder_block_forward.1} parent=1 // pred_check_branch
      %76 = sbr.rel (0) target = $region41
    $region40: #{decoder_block_forward.1} parent=1 // pred_region
      %77 = dma.done [#allocation5], 128
    $region41: #{decoder_block_forward.1} parent=1 // pred_fallthru
      _
    // Predicated region
    $region42: #{decoder_block_forward.1} parent=1 // pred_check
      _
    $region43: #{decoder_block_forward.1} parent=1 // pred_check_branch
      %79 = sbr.rel (0) target = $region45
    $region44: #{decoder_block_forward.1} parent=1 // pred_region
      %80 = dma.done [#allocation7], 16384
    $region45: #{decoder_block_forward.1} parent=1 // pred_fallthru
      _
    // Predicated region
    $region46: #{decoder_block_forward.1} parent=1 // pred_check
      _
    $region47: #{decoder_block_forward.1} parent=1 // pred_check_branch
      %82 = sbr.rel (0) target = $region49
    $region48: #{decoder_block_forward.1} parent=1 // pred_region
      %83 = dma.done [#allocation7], 128
    $region49: #{decoder_block_forward.1} parent=1 // pred_fallthru
      _
    // Predicated region
    $region50: #{decoder_block_forward.1} parent=1 // pred_check
      _
    $region51: #{decoder_block_forward.1} parent=1 // pred_check_branch
      %85 = sbr.rel (0) target = $region53
    $region52: #{decoder_block_forward.1} parent=1 // pred_region
      %86 = dma.done [#allocation10], 16384
    $region53: #{decoder_block_forward.1} parent=1 // pred_fallthru
      _
    %s88 = sld [smem:[#allocation2]]
    %s89 = sld [smem:[#allocation3]]
    %v90 = vld [vmem:[#allocation4] sm:$0xff]
    %v91 = vpack.c.bf16 %v90, %v90
    %v92 = vld [vmem:[%s1] sm:$0xff]
    %v93 = vld [vmem:[%s2] sm:$0x3]
    %v95 = vlaneseq
    %v96 = vshrl.u32 %v95, 7
    %v97 = vsub.s32 0, %v96
    %v98 = vrot.slane %v93, %v97
    %v99 = vlaneseq
    %v100 = vshrl.u32 %v99, 7
    %v101 = vsub.s32 1, %v100
    %v102 = vrot.slane %v93, %v101
    %v106 = vunpack.c.l.b16 %v92
    %v107 = vunpack.c.h.b16 %v92
    %v108 = vpack.c.b16 %v106, %v106
    %v109 = vpack.c.b16 %v107, %v107
    %vm110 = vcmask 64512
    %v112 = vsel %vm110, %v91, 0
    %vm114 = vcmask 1043456
    %v116 = vsel %vm114, %v108, 0
    %v119 = vsel %vm114, %v109, 0
    %121 = vmatprep.subr.bf16.mxu0 %v119
    %122 = vmatpush1.bf16.msra.mxu0 %v116
    %123 = vmatprep.subr.bf16.mxu0 0
    %124 = vmatpush1.bf16.msra.mxu0 0
    %125 = vmatprep.subr.bf16.mxu0 0
    %126 = vmatpush1.bf16.msra.mxu0 0
    %127 = vmatprep.subr.bf16.mxu0 0
    %128 = vmatpush1.bf16.msra.mxu0 0
    %129 = vmatprep.subr.bf16.mxu0 0
    %130 = vmatpush1.bf16.msra.mxu0 0
    %131 = vmatprep.subr.bf16.mxu0 0
    %132 = vmatpush1.bf16.msra.mxu0 0
    %133 = vmatprep.subr.bf16.mxu0 0
    %134 = vmatpush1.bf16.msra.mxu0 0
    %135 = vmatprep.subr.bf16.mxu0 0
    %136 = vmatpush1.bf16.msra.mxu0 0
    %137 = vmatprep.subr.bf16.mxu0 0
    %138 = vmatpush1.bf16.msra.mxu0 0
    %139 = vmatprep.subr.bf16.mxu0 0
    %140 = vmatpush1.bf16.msra.mxu0 0
    %141 = vmatprep.subr.bf16.mxu0 0
    %142 = vmatpush1.bf16.msra.mxu0 0
    %143 = vmatprep.subr.bf16.mxu0 0
    %144 = vmatpush1.bf16.msra.mxu0 0
    %145 = vmatprep.subr.bf16.mxu0 0
    %146 = vmatpush1.bf16.msra.mxu0 0
    %147 = vmatprep.subr.bf16.mxu0 0
    %148 = vmatpush1.bf16.msra.mxu0 0
    %149 = vmatprep.subr.bf16.mxu0 0
    %150 = vmatpush1.bf16.msra.mxu0 0
    %151 = vmatprep.subr.bf16.mxu0 0
    %152 = vmatpush1.bf16.msra.mxu0 0
    %153 = vmatprep.mubr.bf16.mxu0 0
    %154 = vmatmul.mubr.bf16.gmra.mrb[0].mxu0 %v112
    %v155 = vpop.f32.mrb[0].mxu0
    %v156 = vadd.f32 %v98, %v155
    %v157 = vpop.f32.mrb[0].mxu0
    %v158 = vadd.f32 %v102, %v157
    %v159 = vpop.f32.mrb[0].mxu0
    %v160 = vpop.f32.mrb[0].mxu0
    %161 = vdwg.mxu0
    %vm162 = vcmp.ge.f32.partialorder %v156, 0.0
    %vm163 = vcmp.ge.f32.partialorder %v158, 0.0
    %v164 = vstv %s88
    %v165 = vmul.f32 %v164, %v156
    %v166 = vmul.f32 %v164, %v158
    %v167 = vsel %vm162, %v156, %v165
    %v168 = vsel %vm163, %v158, %v166
    %v169 = vpack.c.bf16 %v167, %v167
    %v170 = vpack.c.bf16 %v168, %v168
    %v171 = vld [vmem:[#allocation6] sm:$0xff]
    %v172 = vld [vmem:[#allocation6 + $0x8] sm:$0xff]
    %v173 = vld [vmem:[#allocation6 + $0x10] sm:$0xff]
    %v174 = vld [vmem:[#allocation6 + $0x18] sm:$0xff]
    %v175 = vld [vmem:[#allocation6 + $0x20] sm:$0xff]
    %v176 = vld [vmem:[#allocation6 + $0x28] sm:$0xff]
    %v177 = vld [vmem:[#allocation6 + $0x30] sm:$0xff]
    %v178 = vld [vmem:[#allocation6 + $0x38] sm:$0xff]
    %v179 = vld [vmem:[#allocation6 + $0x40] sm:$0xff]
    %v180 = vld [vmem:[#allocation6 + $0x48] sm:$0xff]
    %v181 = vld [vmem:[#allocation6 + $0x50] sm:$0xff]
    %v182 = vld [vmem:[#allocation6 + $0x58] sm:$0xff]
    %v183 = vld [vmem:[#allocation6 + $0x60] sm:$0xff]
    %v184 = vld [vmem:[#allocation6 + $0x68] sm:$0xff]
    %v185 = vld [vmem:[#allocation6 + $0x70] sm:$0xff]
    %v186 = vld [vmem:[#allocation6 + $0x78] sm:$0xff]
    %v187 = vld [vmem:[#allocation6 + $0x80] sm:$0xff]
    %v188 = vld [vmem:[#allocation6 + $0x88] sm:$0xff]
    %v189 = vld [vmem:[#allocation6 + $0x90] sm:$0xff]
    %v190 = vld [vmem:[#allocation6 + $0x98] sm:$0xff]
    %v191 = vld [vmem:[#allocation6 + $0xa0] sm:$0xff]
    %v192 = vld [vmem:[#allocation6 + $0xa8] sm:$0xff]
    %v193 = vld [vmem:[#allocation6 + $0xb0] sm:$0xff]
    %v194 = vld [vmem:[#allocation6 + $0xb8] sm:$0xff]
    %v195 = vld [vmem:[#allocation6 + $0xc0] sm:$0xff]
    %v196 = vld [vmem:[#allocation6 + $0xc8] sm:$0xff]
    %v197 = vld [vmem:[#allocation6 + $0xd0] sm:$0xff]
    %v198 = vld [vmem:[#allocation6 + $0xd8] sm:$0xff]
    %v199 = vld [vmem:[#allocation6 + $0xe0] sm:$0xff]
    %v200 = vld [vmem:[#allocation6 + $0xe8] sm:$0xff]
    %v201 = vld [vmem:[#allocation6 + $0xf0] sm:$0xff]
    %v202 = vld [vmem:[#allocation6 + $0xf8] sm:$0xff]
    %v203 = vld [vmem:[#allocation6 + $0x100] sm:$0xff]
    %v204 = vld [vmem:[#allocation6 + $0x108] sm:$0xff]
    %v205 = vld [vmem:[#allocation6 + $0x110] sm:$0xff]
    %v206 = vld [vmem:[#allocation6 + $0x118] sm:$0xff]
    %v207 = vld [vmem:[#allocation6 + $0x120] sm:$0xff]
    %v208 = vld [vmem:[#allocation6 + $0x128] sm:$0xff]
    %v209 = vld [vmem:[#allocation6 + $0x130] sm:$0xff]
    %v210 = vld [vmem:[#allocation6 + $0x138] sm:$0xff]
    %v211 = vld [vmem:[#allocation6 + $0x140] sm:$0xff]
    %v212 = vld [vmem:[#allocation6 + $0x148] sm:$0xff]
    %v213 = vld [vmem:[#allocation6 + $0x150] sm:$0xff]
    %v214 = vld [vmem:[#allocation6 + $0x158] sm:$0xff]
    %v215 = vld [vmem:[#allocation6 + $0x160] sm:$0xff]
    %v216 = vld [vmem:[#allocation6 + $0x168] sm:$0xff]
    %v217 = vld [vmem:[#allocation6 + $0x170] sm:$0xff]
    %v218 = vld [vmem:[#allocation6 + $0x178] sm:$0xff]
    %v219 = vld [vmem:[#allocation6 + $0x180] sm:$0xff]
    %v220 = vld [vmem:[#allocation6 + $0x188] sm:$0xff]
    %v221 = vld [vmem:[#allocation6 + $0x190] sm:$0xff]
    %v222 = vld [vmem:[#allocation6 + $0x198] sm:$0xff]
    %v223 = vld [vmem:[#allocation6 + $0x1a0] sm:$0xff]
    %v224 = vld [vmem:[#allocation6 + $0x1a8] sm:$0xff]
    %v225 = vld [vmem:[#allocation6 + $0x1b0] sm:$0xff]
    %v226 = vld [vmem:[#allocation6 + $0x1b8] sm:$0xff]
    %v227 = vld [vmem:[#allocation6 + $0x1c0] sm:$0xff]
    %v228 = vld [vmem:[#allocation6 + $0x1c8] sm:$0xff]
    %v229 = vld [vmem:[#allocation6 + $0x1d0] sm:$0xff]
    %v230 = vld [vmem:[#allocation6 + $0x1d8] sm:$0xff]
    %v231 = vld [vmem:[#allocation6 + $0x1e0] sm:$0xff]
    %v232 = vld [vmem:[#allocation6 + $0x1e8] sm:$0xff]
    %v233 = vld [vmem:[#allocation6 + $0x1f0] sm:$0xff]
    %v234 = vld [vmem:[#allocation6 + $0x1f8] sm:$0xff]
    %v235 = vld [vmem:[#allocation6 + $0x200] sm:$0xff]
    %v236 = vld [vmem:[#allocation6 + $0x208] sm:$0xff]
    %v237 = vld [vmem:[#allocation6 + $0x210] sm:$0xff]
    %v238 = vld [vmem:[#allocation6 + $0x218] sm:$0xff]
    %v239 = vld [vmem:[#allocation6 + $0x220] sm:$0xff]
    %v240 = vld [vmem:[#allocation6 + $0x228] sm:$0xff]
    %v241 = vld [vmem:[#allocation6 + $0x230] sm:$0xff]
    %v242 = vld [vmem:[#allocation6 + $0x238] sm:$0xff]
    %v243 = vld [vmem:[#allocation6 + $0x240] sm:$0xff]
    %v244 = vld [vmem:[#allocation6 + $0x248] sm:$0xff]
    %v245 = vld [vmem:[#allocation6 + $0x250] sm:$0xff]
    %v246 = vld [vmem:[#allocation6 + $0x258] sm:$0xff]
    %v247 = vld [vmem:[#allocation6 + $0x260] sm:$0xff]
    %v248 = vld [vmem:[#allocation6 + $0x268] sm:$0xff]
    %v249 = vld [vmem:[#allocation6 + $0x270] sm:$0xff]
    %v250 = vld [vmem:[#allocation6 + $0x278] sm:$0xff]
    %v251 = vld [vmem:[#allocation6 + $0x280] sm:$0xff]
    %v252 = vld [vmem:[#allocation6 + $0x288] sm:$0xff]
    %v253 = vld [vmem:[#allocation6 + $0x290] sm:$0xff]
    %v254 = vld [vmem:[#allocation6 + $0x298] sm:$0xff]
    %v255 = vld [vmem:[#allocation6 + $0x2a0] sm:$0xff]
    %v256 = vld [vmem:[#allocation6 + $0x2a8] sm:$0xff]
    %v257 = vld [vmem:[#allocation6 + $0x2b0] sm:$0xff]
    %v258 = vld [vmem:[#allocation6 + $0x2b8] sm:$0xff]
    %v259 = vld [vmem:[#allocation6 + $0x2c0] sm:$0xff]
    %v260 = vld [vmem:[#allocation6 + $0x2c8] sm:$0xff]
    %v261 = vld [vmem:[#allocation6 + $0x2d0] sm:$0xff]
    %v262 = vld [vmem:[#allocation6 + $0x2d8] sm:$0xff]
    %v263 = vld [vmem:[#allocation6 + $0x2e0] sm:$0xff]
    %v264 = vld [vmem:[#allocation6 + $0x2e8] sm:$0xff]
    %v265 = vld [vmem:[#allocation6 + $0x2f0] sm:$0xff]
    %v266 = vld [vmem:[#allocation6 + $0x2f8] sm:$0xff]
    %v267 = vld [vmem:[#allocation6 + $0x300] sm:$0xff]
    %v268 = vld [vmem:[#allocation6 + $0x308] sm:$0xff]
    %v269 = vld [vmem:[#allocation6 + $0x310] sm:$0xff]
    %v270 = vld [vmem:[#allocation6 + $0x318] sm:$0xff]
    %v271 = vld [vmem:[#allocation6 + $0x320] sm:$0xff]
    %v272 = vld [vmem:[#allocation6 + $0x328] sm:$0xff]
    %v273 = vld [vmem:[#allocation6 + $0x330] sm:$0xff]
    %v274 = vld [vmem:[#allocation6 + $0x338] sm:$0xff]
    %v275 = vld [vmem:[#allocation6 + $0x340] sm:$0xff]
    %v276 = vld [vmem:[#allocation6 + $0x348] sm:$0xff]
    %v277 = vld [vmem:[#allocation6 + $0x350] sm:$0xff]
    %v278 = vld [vmem:[#allocation6 + $0x358] sm:$0xff]
    %v279 = vld [vmem:[#allocation6 + $0x360] sm:$0xff]
    %v280 = vld [vmem:[#allocation6 + $0x368] sm:$0xff]
    %v281 = vld [vmem:[#allocation6 + $0x370] sm:$0xff]
    %v282 = vld [vmem:[#allocation6 + $0x378] sm:$0xff]
    %v283 = vld [vmem:[#allocation6 + $0x380] sm:$0xff]
    %v284 = vld [vmem:[#allocation6 + $0x388] sm:$0xff]
    %v285 = vld [vmem:[#allocation6 + $0x390] sm:$0xff]
    %v286 = vld [vmem:[#allocation6 + $0x398] sm:$0xff]
    %v287 = vld [vmem:[#allocation6 + $0x3a0] sm:$0xff]
    %v288 = vld [vmem:[#allocation6 + $0x3a8] sm:$0xff]
    %v289 = vld [vmem:[#allocation6 + $0x3b0] sm:$0xff]
    %v290 = vld [vmem:[#allocation6 + $0x3b8] sm:$0xff]
    %v291 = vld [vmem:[#allocation6 + $0x3c0] sm:$0xff]
    %v292 = vld [vmem:[#allocation6 + $0x3c8] sm:$0xff]
    %v293 = vld [vmem:[#allocation6 + $0x3d0] sm:$0xff]
    %v294 = vld [vmem:[#allocation6 + $0x3d8] sm:$0xff]
    %v295 = vld [vmem:[#allocation6 + $0x3e0] sm:$0xff]
    %v296 = vld [vmem:[#allocation6 + $0x3e8] sm:$0xff]
    %v297 = vld [vmem:[#allocation6 + $0x3f0] sm:$0xff]
    %v298 = vld [vmem:[#allocation6 + $0x3f8] sm:$0xff]
    %v299 = vld [vmem:[#allocation8] sm:$0xff]
    %v301 = vlaneseq
    %v302 = vshrl.u32 %v301, 7
    %v303 = vsub.s32 0, %v302
    %v304 = vrot.slane %v299, %v303
    %v305 = vlaneseq
    %v306 = vshrl.u32 %v305, 7
    %v307 = vsub.s32 1, %v306
    %v308 = vrot.slane %v299, %v307
    %v309 = vlaneseq
    %v310 = vshrl.u32 %v309, 7
    %v311 = vsub.s32 2, %v310
    %v312 = vrot.slane %v299, %v311
    %v313 = vlaneseq
    %v314 = vshrl.u32 %v313, 7
    %v315 = vsub.s32 3, %v314
    %v316 = vrot.slane %v299, %v315
    %v317 = vlaneseq
    %v318 = vshrl.u32 %v317, 7
    %v319 = vsub.s32 4, %v318
    %v320 = vrot.slane %v299, %v319
    %v321 = vlaneseq
    %v322 = vshrl.u32 %v321, 7
    %v323 = vsub.s32 5, %v322
    %v324 = vrot.slane %v299, %v323
    %v325 = vlaneseq
    %v326 = vshrl.u32 %v325, 7
    %v327 = vsub.s32 6, %v326
    %v328 = vrot.slane %v299, %v327
    %v329 = vlaneseq
    %v330 = vshrl.u32 %v329, 7
    %v331 = vsub.s32 7, %v330
    %v332 = vrot.slane %v299, %v331
    %v469 = vunpack.c.l.b16 %v171
    %v470 = vunpack.c.h.b16 %v171
    %v471 = vunpack.c.l.b16 %v172
    %v472 = vunpack.c.h.b16 %v172
    %v473 = vunpack.c.l.b16 %v173
    %v474 = vunpack.c.h.b16 %v173
    %v475 = vunpack.c.l.b16 %v174
    %v476 = vunpack.c.h.b16 %v174
    %v477 = vunpack.c.l.b16 %v175
    %v478 = vunpack.c.h.b16 %v175
    %v479 = vunpack.c.l.b16 %v176
    %v480 = vunpack.c.h.b16 %v176
    %v481 = vunpack.c.l.b16 %v177
    %v482 = vunpack.c.h.b16 %v177
    %v483 = vunpack.c.l.b16 %v178
    %v484 = vunpack.c.h.b16 %v178
    %v485 = vunpack.c.l.b16 %v179
    %v486 = vunpack.c.h.b16 %v179
    %v487 = vunpack.c.l.b16 %v180
    %v488 = vunpack.c.h.b16 %v180
    %v489 = vunpack.c.l.b16 %v181
    %v490 = vunpack.c.h.b16 %v181
    %v491 = vunpack.c.l.b16 %v182
    %v492 = vunpack.c.h.b16 %v182
    %v493 = vunpack.c.l.b16 %v183
    %v494 = vunpack.c.h.b16 %v183
    %v495 = vunpack.c.l.b16 %v184
    %v496 = vunpack.c.h.b16 %v184
    %v497 = vunpack.c.l.b16 %v185
    %v498 = vunpack.c.h.b16 %v185
    %v499 = vunpack.c.l.b16 %v186
    %v500 = vunpack.c.h.b16 %v186
    %v501 = vunpack.c.l.b16 %v187
    %v502 = vunpack.c.h.b16 %v187
    %v503 = vunpack.c.l.b16 %v188
    %v504 = vunpack.c.h.b16 %v188
    %v505 = vunpack.c.l.b16 %v189
    %v506 = vunpack.c.h.b16 %v189
    %v507 = vunpack.c.l.b16 %v190
    %v508 = vunpack.c.h.b16 %v190
    %v509 = vunpack.c.l.b16 %v191
    %v510 = vunpack.c.h.b16 %v191
    %v511 = vunpack.c.l.b16 %v192
    %v512 = vunpack.c.h.b16 %v192
    %v513 = vunpack.c.l.b16 %v193
    %v514 = vunpack.c.h.b16 %v193
    %v515 = vunpack.c.l.b16 %v194
    %v516 = vunpack.c.h.b16 %v194
    %v517 = vunpack.c.l.b16 %v195
    %v518 = vunpack.c.h.b16 %v195
    %v519 = vunpack.c.l.b16 %v196
    %v520 = vunpack.c.h.b16 %v196
    %v521 = vunpack.c.l.b16 %v197
    %v522 = vunpack.c.h.b16 %v197
    %v523 = vunpack.c.l.b16 %v198
    %v524 = vunpack.c.h.b16 %v198
    %v525 = vunpack.c.l.b16 %v199
    %v526 = vunpack.c.h.b16 %v199
    %v527 = vunpack.c.l.b16 %v200
    %v528 = vunpack.c.h.b16 %v200
    %v529 = vunpack.c.l.b16 %v201
    %v530 = vunpack.c.h.b16 %v201
    %v531 = vunpack.c.l.b16 %v202
    %v532 = vunpack.c.h.b16 %v202
    %v533 = vunpack.c.l.b16 %v203
    %v534 = vunpack.c.h.b16 %v203
    %v535 = vunpack.c.l.b16 %v204
    %v536 = vunpack.c.h.b16 %v204
    %v537 = vunpack.c.l.b16 %v205
    %v538 = vunpack.c.h.b16 %v205
    %v539 = vunpack.c.l.b16 %v206
    %v540 = vunpack.c.h.b16 %v206
    %v541 = vunpack.c.l.b16 %v207
    %v542 = vunpack.c.h.b16 %v207
    %v543 = vunpack.c.l.b16 %v208
    %v544 = vunpack.c.h.b16 %v208
    %v545 = vunpack.c.l.b16 %v209
    %v546 = vunpack.c.h.b16 %v209
    %v547 = vunpack.c.l.b16 %v210
    %v548 = vunpack.c.h.b16 %v210
    %v549 = vunpack.c.l.b16 %v211
    %v550 = vunpack.c.h.b16 %v211
    %v551 = vunpack.c.l.b16 %v212
    %v552 = vunpack.c.h.b16 %v212
    %v553 = vunpack.c.l.b16 %v213
    %v554 = vunpack.c.h.b16 %v213
    %v555 = vunpack.c.l.b16 %v214
    %v556 = vunpack.c.h.b16 %v214
    %v557 = vunpack.c.l.b16 %v215
    %v558 = vunpack.c.h.b16 %v215
    %v559 = vunpack.c.l.b16 %v216
    %v560 = vunpack.c.h.b16 %v216
    %v561 = vunpack.c.l.b16 %v217
    %v562 = vunpack.c.h.b16 %v217
    %v563 = vunpack.c.l.b16 %v218
    %v564 = vunpack.c.h.b16 %v218
    %v565 = vunpack.c.l.b16 %v219
    %v566 = vunpack.c.h.b16 %v219
    %v567 = vunpack.c.l.b16 %v220
    %v568 = vunpack.c.h.b16 %v220
    %v569 = vunpack.c.l.b16 %v221
    %v570 = vunpack.c.h.b16 %v221
    %v571 = vunpack.c.l.b16 %v222
    %v572 = vunpack.c.h.b16 %v222
    %v573 = vunpack.c.l.b16 %v223
    %v574 = vunpack.c.h.b16 %v223
    %v575 = vunpack.c.l.b16 %v224
    %v576 = vunpack.c.h.b16 %v224
    %v577 = vunpack.c.l.b16 %v225
    %v578 = vunpack.c.h.b16 %v225
    %v579 = vunpack.c.l.b16 %v226
    %v580 = vunpack.c.h.b16 %v226
    %v581 = vunpack.c.l.b16 %v227
    %v582 = vunpack.c.h.b16 %v227
    %v583 = vunpack.c.l.b16 %v228
    %v584 = vunpack.c.h.b16 %v228
    %v585 = vunpack.c.l.b16 %v229
    %v586 = vunpack.c.h.b16 %v229
    %v587 = vunpack.c.l.b16 %v230
    %v588 = vunpack.c.h.b16 %v230
    %v589 = vunpack.c.l.b16 %v231
    %v590 = vunpack.c.h.b16 %v231
    %v591 = vunpack.c.l.b16 %v232
    %v592 = vunpack.c.h.b16 %v232
    %v593 = vunpack.c.l.b16 %v233
    %v594 = vunpack.c.h.b16 %v233
    %v595 = vunpack.c.l.b16 %v234
    %v596 = vunpack.c.h.b16 %v234
    %v597 = vunpack.c.l.b16 %v235
    %v598 = vunpack.c.h.b16 %v235
    %v599 = vunpack.c.l.b16 %v236
    %v600 = vunpack.c.h.b16 %v236
    %v601 = vunpack.c.l.b16 %v237
    %v602 = vunpack.c.h.b16 %v237
    %v603 = vunpack.c.l.b16 %v238
    %v604 = vunpack.c.h.b16 %v238
    %v605 = vunpack.c.l.b16 %v239
    %v606 = vunpack.c.h.b16 %v239
    %v607 = vunpack.c.l.b16 %v240
    %v608 = vunpack.c.h.b16 %v240
    %v609 = vunpack.c.l.b16 %v241
    %v610 = vunpack.c.h.b16 %v241
    %v611 = vunpack.c.l.b16 %v242
    %v612 = vunpack.c.h.b16 %v242
    %v613 = vunpack.c.l.b16 %v243
    %v614 = vunpack.c.h.b16 %v243
    %v615 = vunpack.c.l.b16 %v244
    %v616 = vunpack.c.h.b16 %v244
    %v617 = vunpack.c.l.b16 %v245
    %v618 = vunpack.c.h.b16 %v245
    %v619 = vunpack.c.l.b16 %v246
    %v620 = vunpack.c.h.b16 %v246
    %v621 = vunpack.c.l.b16 %v247
    %v622 = vunpack.c.h.b16 %v247
    %v623 = vunpack.c.l.b16 %v248
    %v624 = vunpack.c.h.b16 %v248
    %v625 = vunpack.c.l.b16 %v249
    %v626 = vunpack.c.h.b16 %v249
    %v627 = vunpack.c.l.b16 %v250
    %v628 = vunpack.c.h.b16 %v250
    %v629 = vunpack.c.l.b16 %v251
    %v630 = vunpack.c.h.b16 %v251
    %v631 = vunpack.c.l.b16 %v252
    %v632 = vunpack.c.h.b16 %v252
    %v633 = vunpack.c.l.b16 %v253
    %v634 = vunpack.c.h.b16 %v253
    %v635 = vunpack.c.l.b16 %v254
    %v636 = vunpack.c.h.b16 %v254
    %v637 = vunpack.c.l.b16 %v255
    %v638 = vunpack.c.h.b16 %v255
    %v639 = vunpack.c.l.b16 %v256
    %v640 = vunpack.c.h.b16 %v256
    %v641 = vunpack.c.l.b16 %v257
    %v642 = vunpack.c.h.b16 %v257
    %v643 = vunpack.c.l.b16 %v258
    %v644 = vunpack.c.h.b16 %v258
    %v645 = vunpack.c.l.b16 %v259
    %v646 = vunpack.c.h.b16 %v259
    %v647 = vunpack.c.l.b16 %v260
    %v648 = vunpack.c.h.b16 %v260
    %v649 = vunpack.c.l.b16 %v261
    %v650 = vunpack.c.h.b16 %v261
    %v651 = vunpack.c.l.b16 %v262
    %v652 = vunpack.c.h.b16 %v262
    %v653 = vunpack.c.l.b16 %v263
    %v654 = vunpack.c.h.b16 %v263
    %v655 = vunpack.c.l.b16 %v264
    %v656 = vunpack.c.h.b16 %v264
    %v657 = vunpack.c.l.b16 %v265
    %v658 = vunpack.c.h.b16 %v265
    %v659 = vunpack.c.l.b16 %v266
    %v660 = vunpack.c.h.b16 %v266
    %v661 = vunpack.c.l.b16 %v267
    %v662 = vunpack.c.h.b16 %v267
    %v663 = vunpack.c.l.b16 %v268
    %v664 = vunpack.c.h.b16 %v268
    %v665 = vunpack.c.l.b16 %v269
    %v666 = vunpack.c.h.b16 %v269
    %v667 = vunpack.c.l.b16 %v270
    %v668 = vunpack.c.h.b16 %v270
    %v669 = vunpack.c.l.b16 %v271
    %v670 = vunpack.c.h.b16 %v271
    %v671 = vunpack.c.l.b16 %v272
    %v672 = vunpack.c.h.b16 %v272
    %v673 = vunpack.c.l.b16 %v273
    %v674 = vunpack.c.h.b16 %v273
    %v675 = vunpack.c.l.b16 %v274
    %v676 = vunpack.c.h.b16 %v274
    %v677 = vunpack.c.l.b16 %v275
    %v678 = vunpack.c.h.b16 %v275
    %v679 = vunpack.c.l.b16 %v276
    %v680 = vunpack.c.h.b16 %v276
    %v681 = vunpack.c.l.b16 %v277
    %v682 = vunpack.c.h.b16 %v277
    %v683 = vunpack.c.l.b16 %v278
    %v684 = vunpack.c.h.b16 %v278
    %v685 = vunpack.c.l.b16 %v279
    %v686 = vunpack.c.h.b16 %v279
    %v687 = vunpack.c.l.b16 %v280
    %v688 = vunpack.c.h.b16 %v280
    %v689 = vunpack.c.l.b16 %v281
    %v690 = vunpack.c.h.b16 %v281
    %v691 = vunpack.c.l.b16 %v282
    %v692 = vunpack.c.h.b16 %v282
    %v693 = vunpack.c.l.b16 %v283
    %v694 = vunpack.c.h.b16 %v283
    %v695 = vunpack.c.l.b16 %v284
    %v696 = vunpack.c.h.b16 %v284
    %v697 = vunpack.c.l.b16 %v285
    %v698 = vunpack.c.h.b16 %v285
    %v699 = vunpack.c.l.b16 %v286
    %v700 = vunpack.c.h.b16 %v286
    %v701 = vunpack.c.l.b16 %v287
    %v702 = vunpack.c.h.b16 %v287
    %v703 = vunpack.c.l.b16 %v288
    %v704 = vunpack.c.h.b16 %v288
    %v705 = vunpack.c.l.b16 %v289
    %v706 = vunpack.c.h.b16 %v289
    %v707 = vunpack.c.l.b16 %v290
    %v708 = vunpack.c.h.b16 %v290
    %v709 = vunpack.c.l.b16 %v291
    %v710 = vunpack.c.h.b16 %v291
    %v711 = vunpack.c.l.b16 %v292
    %v712 = vunpack.c.h.b16 %v292
    %v713 = vunpack.c.l.b16 %v293
    %v714 = vunpack.c.h.b16 %v293
    %v715 = vunpack.c.l.b16 %v294
    %v716 = vunpack.c.h.b16 %v294
    %v717 = vunpack.c.l.b16 %v295
    %v718 = vunpack.c.h.b16 %v295
    %v719 = vunpack.c.l.b16 %v296
    %v720 = vunpack.c.h.b16 %v296
    %v721 = vunpack.c.l.b16 %v297
    %v722 = vunpack.c.h.b16 %v297
    %v723 = vunpack.c.l.b16 %v298
    %v724 = vunpack.c.h.b16 %v298
    %v725 = vpack.c.b16 %v477, %v469
    %v726 = vpack.c.b16 %v478, %v470
    %v727 = vpack.c.b16 %v479, %v471
    %v728 = vpack.c.b16 %v480, %v472
    %v729 = vpack.c.b16 %v481, %v473
    %v730 = vpack.c.b16 %v482, %v474
    %v731 = vpack.c.b16 %v483, %v475
    %v732 = vpack.c.b16 %v484, %v476
    %v733 = vpack.c.b16 %v493, %v485
    %v734 = vpack.c.b16 %v494, %v486
    %v735 = vpack.c.b16 %v495, %v487
    %v736 = vpack.c.b16 %v496, %v488
    %v737 = vpack.c.b16 %v497, %v489
    %v738 = vpack.c.b16 %v498, %v490
    %v739 = vpack.c.b16 %v499, %v491
    %v740 = vpack.c.b16 %v500, %v492
    %v741 = vpack.c.b16 %v509, %v501
    %v742 = vpack.c.b16 %v510, %v502
    %v743 = vpack.c.b16 %v511, %v503
    %v744 = vpack.c.b16 %v512, %v504
    %v745 = vpack.c.b16 %v513, %v505
    %v746 = vpack.c.b16 %v514, %v506
    %v747 = vpack.c.b16 %v515, %v507
    %v748 = vpack.c.b16 %v516, %v508
    %v749 = vpack.c.b16 %v525, %v517
    %v750 = vpack.c.b16 %v526, %v518
    %v751 = vpack.c.b16 %v527, %v519
    %v752 = vpack.c.b16 %v528, %v520
    %v753 = vpack.c.b16 %v529, %v521
    %v754 = vpack.c.b16 %v530, %v522
    %v755 = vpack.c.b16 %v531, %v523
    %v756 = vpack.c.b16 %v532, %v524
    %v757 = vpack.c.b16 %v541, %v533
    %v758 = vpack.c.b16 %v542, %v534
    %v759 = vpack.c.b16 %v543, %v535
    %v760 = vpack.c.b16 %v544, %v536
    %v761 = vpack.c.b16 %v545, %v537
    %v762 = vpack.c.b16 %v546, %v538
    %v763 = vpack.c.b16 %v547, %v539
    %v764 = vpack.c.b16 %v548, %v540
    %v765 = vpack.c.b16 %v557, %v549
    %v766 = vpack.c.b16 %v558, %v550
    %v767 = vpack.c.b16 %v559, %v551
    %v768 = vpack.c.b16 %v560, %v552
    %v769 = vpack.c.b16 %v561, %v553
    %v770 = vpack.c.b16 %v562, %v554
    %v771 = vpack.c.b16 %v563, %v555
    %v772 = vpack.c.b16 %v564, %v556
    %v773 = vpack.c.b16 %v573, %v565
    %v774 = vpack.c.b16 %v574, %v566
    %v775 = vpack.c.b16 %v575, %v567
    %v776 = vpack.c.b16 %v576, %v568
    %v777 = vpack.c.b16 %v577, %v569
    %v778 = vpack.c.b16 %v578, %v570
    %v779 = vpack.c.b16 %v579, %v571
    %v780 = vpack.c.b16 %v580, %v572
    %v781 = vpack.c.b16 %v589, %v581
    %v782 = vpack.c.b16 %v590, %v582
    %v783 = vpack.c.b16 %v591, %v583
    %v784 = vpack.c.b16 %v592, %v584
    %v785 = vpack.c.b16 %v593, %v585
    %v786 = vpack.c.b16 %v594, %v586
    %v787 = vpack.c.b16 %v595, %v587
    %v788 = vpack.c.b16 %v596, %v588
    %v789 = vpack.c.b16 %v605, %v597
    %v790 = vpack.c.b16 %v606, %v598
    %v791 = vpack.c.b16 %v607, %v599
    %v792 = vpack.c.b16 %v608, %v600
    %v793 = vpack.c.b16 %v609, %v601
    %v794 = vpack.c.b16 %v610, %v602
    %v795 = vpack.c.b16 %v611, %v603
    %v796 = vpack.c.b16 %v612, %v604
    %v797 = vpack.c.b16 %v621, %v613
    %v798 = vpack.c.b16 %v622, %v614
    %v799 = vpack.c.b16 %v623, %v615
    %v800 = vpack.c.b16 %v624, %v616
    %v801 = vpack.c.b16 %v625, %v617
    %v802 = vpack.c.b16 %v626, %v618
    %v803 = vpack.c.b16 %v627, %v619
    %v804 = vpack.c.b16 %v628, %v620
    %v805 = vpack.c.b16 %v637, %v629
    %v806 = vpack.c.b16 %v638, %v630
    %v807 = vpack.c.b16 %v639, %v631
    %v808 = vpack.c.b16 %v640, %v632
    %v809 = vpack.c.b16 %v641, %v633
    %v810 = vpack.c.b16 %v642, %v634
    %v811 = vpack.c.b16 %v643, %v635
    %v812 = vpack.c.b16 %v644, %v636
    %v813 = vpack.c.b16 %v653, %v645
    %v814 = vpack.c.b16 %v654, %v646
    %v815 = vpack.c.b16 %v655, %v647
    %v816 = vpack.c.b16 %v656, %v648
    %v817 = vpack.c.b16 %v657, %v649
    %v818 = vpack.c.b16 %v658, %v650
    %v819 = vpack.c.b16 %v659, %v651
    %v820 = vpack.c.b16 %v660, %v652
    %v821 = vpack.c.b16 %v669, %v661
    %v822 = vpack.c.b16 %v670, %v662
    %v823 = vpack.c.b16 %v671, %v663
    %v824 = vpack.c.b16 %v672, %v664
    %v825 = vpack.c.b16 %v673, %v665
    %v826 = vpack.c.b16 %v674, %v666
    %v827 = vpack.c.b16 %v675, %v667
    %v828 = vpack.c.b16 %v676, %v668
    %v829 = vpack.c.b16 %v685, %v677
    %v830 = vpack.c.b16 %v686, %v678
    %v831 = vpack.c.b16 %v687, %v679
    %v832 = vpack.c.b16 %v688, %v680
    %v833 = vpack.c.b16 %v689, %v681
    %v834 = vpack.c.b16 %v690, %v682
    %v835 = vpack.c.b16 %v691, %v683
    %v836 = vpack.c.b16 %v692, %v684
    %v837 = vpack.c.b16 %v701, %v693
    %v838 = vpack.c.b16 %v702, %v694
    %v839 = vpack.c.b16 %v703, %v695
    %v840 = vpack.c.b16 %v704, %v696
    %v841 = vpack.c.b16 %v705, %v697
    %v842 = vpack.c.b16 %v706, %v698
    %v843 = vpack.c.b16 %v707, %v699
    %v844 = vpack.c.b16 %v708, %v700
    %v845 = vpack.c.b16 %v717, %v709
    %v846 = vpack.c.b16 %v718, %v710
    %v847 = vpack.c.b16 %v719, %v711
    %v848 = vpack.c.b16 %v720, %v712
    %v849 = vpack.c.b16 %v721, %v713
    %v850 = vpack.c.b16 %v722, %v714
    %v851 = vpack.c.b16 %v723, %v715
    %v852 = vpack.c.b16 %v724, %v716
    %981 = vmatprep.subr.bf16.mxu0 %v726
    %982 = vmatpush1.bf16.msra.mxu0 %v725
    %983 = vmatprep.subr.bf16.mxu0 %v734
    %984 = vmatpush1.bf16.msra.mxu0 %v733
    %985 = vmatprep.subr.bf16.mxu0 %v742
    %986 = vmatpush1.bf16.msra.mxu0 %v741
    %987 = vmatprep.subr.bf16.mxu0 %v750
    %988 = vmatpush1.bf16.msra.mxu0 %v749
    %989 = vmatprep.subr.bf16.mxu0 %v758
    %990 = vmatpush1.bf16.msra.mxu0 %v757
    %991 = vmatprep.subr.bf16.mxu0 %v766
    %992 = vmatpush1.bf16.msra.mxu0 %v765
    %993 = vmatprep.subr.bf16.mxu0 %v774
    %994 = vmatpush1.bf16.msra.mxu0 %v773
    %995 = vmatprep.subr.bf16.mxu0 %v782
    %996 = vmatpush1.bf16.msra.mxu0 %v781
    %997 = vmatprep.subr.bf16.mxu0 %v790
    %998 = vmatpush1.bf16.msra.mxu0 %v789
    %999 = vmatprep.subr.bf16.mxu0 %v798
    %1000 = vmatpush1.bf16.msra.mxu0 %v797
    %1001 = vmatprep.subr.bf16.mxu0 %v806
    %1002 = vmatpush1.bf16.msra.mxu0 %v805
    %1003 = vmatprep.subr.bf16.mxu0 %v814
    %1004 = vmatpush1.bf16.msra.mxu0 %v813
    %1005 = vmatprep.subr.bf16.mxu0 %v822
    %1006 = vmatpush1.bf16.msra.mxu0 %v821
    %1007 = vmatprep.subr.bf16.mxu0 %v830
    %1008 = vmatpush1.bf16.msra.mxu0 %v829
    %1009 = vmatprep.subr.bf16.mxu0 %v838
    %1010 = vmatpush1.bf16.msra.mxu0 %v837
    %1011 = vmatprep.subr.bf16.mxu0 %v846
    %1012 = vmatpush1.bf16.msra.mxu0 %v845
    %1013 = vmatprep.mubr.bf16.mxu0 %v170
    %1014 = vmatmul.mubr.bf16.gmra.mrb[0].mxu0 %v169
    %v1015 = vpop.f32.mrb[0].mxu0
    %v1016 = vadd.f32 %v304, %v1015
    %v1017 = vpop.f32.mrb[0].mxu0
    %v1018 = vadd.f32 %v308, %v1017
    %v1019 = vpop.f32.mrb[0].mxu0
    %v1020 = vpop.f32.mrb[0].mxu0
    %1021 = vdwg.mxu0
    %1022 = vmatprep.subr.bf16.mxu0 %v728
    %1023 = vmatpush1.bf16.msra.mxu0 %v727
    %1024 = vmatprep.subr.bf16.mxu0 %v736
    %1025 = vmatpush1.bf16.msra.mxu0 %v735
    %1026 = vmatprep.subr.bf16.mxu0 %v744
    %1027 = vmatpush1.bf16.msra.mxu0 %v743
    %1028 = vmatprep.subr.bf16.mxu0 %v752
    %1029 = vmatpush1.bf16.msra.mxu0 %v751
    %1030 = vmatprep.subr.bf16.mxu0 %v760
    %1031 = vmatpush1.bf16.msra.mxu0 %v759
    %1032 = vmatprep.subr.bf16.mxu0 %v768
    %1033 = vmatpush1.bf16.msra.mxu0 %v767
    %1034 = vmatprep.subr.bf16.mxu0 %v776
    %1035 = vmatpush1.bf16.msra.mxu0 %v775
    %1036 = vmatprep.subr.bf16.mxu0 %v784
    %1037 = vmatpush1.bf16.msra.mxu0 %v783
    %1038 = vmatprep.subr.bf16.mxu0 %v792
    %1039 = vmatpush1.bf16.msra.mxu0 %v791
    %1040 = vmatprep.subr.bf16.mxu0 %v800
    %1041 = vmatpush1.bf16.msra.mxu0 %v799
    %1042 = vmatprep.subr.bf16.mxu0 %v808
    %1043 = vmatpush1.bf16.msra.mxu0 %v807
    %1044 = vmatprep.subr.bf16.mxu0 %v816
    %1045 = vmatpush1.bf16.msra.mxu0 %v815
    %1046 = vmatprep.subr.bf16.mxu0 %v824
    %1047 = vmatpush1.bf16.msra.mxu0 %v823
    %1048 = vmatprep.subr.bf16.mxu0 %v832
    %1049 = vmatpush1.bf16.msra.mxu0 %v831
    %1050 = vmatprep.subr.bf16.mxu0 %v840
    %1051 = vmatpush1.bf16.msra.mxu0 %v839
    %1052 = vmatprep.subr.bf16.mxu0 %v848
    %1053 = vmatpush1.bf16.msra.mxu0 %v847
    %1054 = vmatprep.mubr.bf16.mxu0 %v170
    %1055 = vmatmul.mubr.bf16.gmra.mrb[0].mxu0 %v169
    %v1056 = vpop.f32.mrb[0].mxu0
    %v1057 = vadd.f32 %v312, %v1056
    %v1058 = vpop.f32.mrb[0].mxu0
    %v1059 = vadd.f32 %v316, %v1058
    %v1060 = vpop.f32.mrb[0].mxu0
    %v1061 = vpop.f32.mrb[0].mxu0
    %1062 = vdwg.mxu0
    %1063 = vmatprep.subr.bf16.mxu0 %v730
    %1064 = vmatpush1.bf16.msra.mxu0 %v729
    %1065 = vmatprep.subr.bf16.mxu0 %v738
    %1066 = vmatpush1.bf16.msra.mxu0 %v737
    %1067 = vmatprep.subr.bf16.mxu0 %v746
    %1068 = vmatpush1.bf16.msra.mxu0 %v745
    %1069 = vmatprep.subr.bf16.mxu0 %v754
    %1070 = vmatpush1.bf16.msra.mxu0 %v753
    %1071 = vmatprep.subr.bf16.mxu0 %v762
    %1072 = vmatpush1.bf16.msra.mxu0 %v761
    %1073 = vmatprep.subr.bf16.mxu0 %v770
    %1074 = vmatpush1.bf16.msra.mxu0 %v769
    %1075 = vmatprep.subr.bf16.mxu0 %v778
    %1076 = vmatpush1.bf16.msra.mxu0 %v777
    %1077 = vmatprep.subr.bf16.mxu0 %v786
    %1078 = vmatpush1.bf16.msra.mxu0 %v785
    %1079 = vmatprep.subr.bf16.mxu0 %v794
    %1080 = vmatpush1.bf16.msra.mxu0 %v793
    %1081 = vmatprep.subr.bf16.mxu0 %v802
    %1082 = vmatpush1.bf16.msra.mxu0 %v801
    %1083 = vmatprep.subr.bf16.mxu0 %v810
    %1084 = vmatpush1.bf16.msra.mxu0 %v809
    %1085 = vmatprep.subr.bf16.mxu0 %v818
    %1086 = vmatpush1.bf16.msra.mxu0 %v817
    %1087 = vmatprep.subr.bf16.mxu0 %v826
    %1088 = vmatpush1.bf16.msra.mxu0 %v825
    %1089 = vmatprep.subr.bf16.mxu0 %v834
    %1090 = vmatpush1.bf16.msra.mxu0 %v833
    %1091 = vmatprep.subr.bf16.mxu0 %v842
    %1092 = vmatpush1.bf16.msra.mxu0 %v841
    %1093 = vmatprep.subr.bf16.mxu0 %v850
    %1094 = vmatpush1.bf16.msra.mxu0 %v849
    %1095 = vmatprep.mubr.bf16.mxu0 %v170
    %1096 = vmatmul.mubr.bf16.gmra.mrb[0].mxu0 %v169
    %v1097 = vpop.f32.mrb[0].mxu0
    %v1098 = vadd.f32 %v320, %v1097
    %v1099 = vpop.f32.mrb[0].mxu0
    %v1100 = vadd.f32 %v324, %v1099
    %v1101 = vpop.f32.mrb[0].mxu0
    %v1102 = vpop.f32.mrb[0].mxu0
    %1103 = vdwg.mxu0
    %1104 = vmatprep.subr.bf16.mxu0 %v732
    %1105 = vmatpush1.bf16.msra.mxu0 %v731
    %1106 = vmatprep.subr.bf16.mxu0 %v740
    %1107 = vmatpush1.bf16.msra.mxu0 %v739
    %1108 = vmatprep.subr.bf16.mxu0 %v748
    %1109 = vmatpush1.bf16.msra.mxu0 %v747
    %1110 = vmatprep.subr.bf16.mxu0 %v756
    %1111 = vmatpush1.bf16.msra.mxu0 %v755
    %1112 = vmatprep.subr.bf16.mxu0 %v764
    %1113 = vmatpush1.bf16.msra.mxu0 %v763
    %1114 = vmatprep.subr.bf16.mxu0 %v772
    %1115 = vmatpush1.bf16.msra.mxu0 %v771
    %1116 = vmatprep.subr.bf16.mxu0 %v780
    %1117 = vmatpush1.bf16.msra.mxu0 %v779
    %1118 = vmatprep.subr.bf16.mxu0 %v788
    %1119 = vmatpush1.bf16.msra.mxu0 %v787
    %1120 = vmatprep.subr.bf16.mxu0 %v796
    %1121 = vmatpush1.bf16.msra.mxu0 %v795
    %1122 = vmatprep.subr.bf16.mxu0 %v804
    %1123 = vmatpush1.bf16.msra.mxu0 %v803
    %1124 = vmatprep.subr.bf16.mxu0 %v812
    %1125 = vmatpush1.bf16.msra.mxu0 %v811
    %1126 = vmatprep.subr.bf16.mxu0 %v820
    %1127 = vmatpush1.bf16.msra.mxu0 %v819
    %1128 = vmatprep.subr.bf16.mxu0 %v828
    %1129 = vmatpush1.bf16.msra.mxu0 %v827
    %1130 = vmatprep.subr.bf16.mxu0 %v836
    %1131 = vmatpush1.bf16.msra.mxu0 %v835
    %1132 = vmatprep.subr.bf16.mxu0 %v844
    %1133 = vmatpush1.bf16.msra.mxu0 %v843
    %1134 = vmatprep.subr.bf16.mxu0 %v852
    %1135 = vmatpush1.bf16.msra.mxu0 %v851
    %1136 = vmatprep.mubr.bf16.mxu0 %v170
    %1137 = vmatmul.mubr.bf16.gmra.mrb[0].mxu0 %v169
    %v1138 = vpop.f32.mrb[0].mxu0
    %v1139 = vadd.f32 %v328, %v1138
    %v1140 = vpop.f32.mrb[0].mxu0
    %v1141 = vadd.f32 %v332, %v1140
    %v1142 = vpop.f32.mrb[0].mxu0
    %v1143 = vpop.f32.mrb[0].mxu0
    %1144 = vdwg.mxu0
    %v1145 = vadd.f32 %v1016, %v1018
    %1146 = vadd.xlane.f32.xlu0 %v1145
    %v1147 = vpop.xlane.xlu0 %1146
    %v1148 = vrot.slane %v1147, 4
    %v1149 = vadd.f32 %v1147, %v1148
    %v1150 = vrot.slane %v1149, 2
    %v1151 = vadd.f32 %v1149, %v1150
    %v1152 = vrot.slane %v1151, 1
    %v1153 = vadd.f32 %v1151, %v1152
    %s1154 = vtos %v1153
    %v1155 = vmul.f32 %v1016, %v1016
    %v1156 = vmul.f32 %v1018, %v1018
    %v1157 = vadd.f32 %v1155, %v1156
    %1158 = vadd.xlane.f32.xlu0 %v1157
    %v1159 = vpop.xlane.xlu0 %1158
    %v1160 = vrot.slane %v1159, 4
    %v1161 = vadd.f32 %v1159, %v1160
    %v1162 = vrot.slane %v1161, 2
    %v1163 = vadd.f32 %v1161, %v1162
    %v1164 = vrot.slane %v1163, 1
    %v1165 = vadd.f32 %v1163, %v1164
    %s1166 = vtos %v1165
    %v1167 = vrcp.pop 2048.0
    %s1168 = vtos %v1167
    %s1169 = smul.f32 %s1154, %s1168
    %v1170 = vrcp.pop 2048.0
    %s1171 = vtos %v1170
    %s1172 = smul.f32 %s1166, %s1171
    %s1173 = smul.f32 %s1169, %s1169
    %s1174 = ssub.f32 %s1172, %s1173
    %v1175 = vstv %s1169
    %v1176 = vsub.f32 %v1016, %v1175
    %v1177 = vsub.f32 %v1018, %v1175
    %s1178 = sadd.f32 %s1174, 1e-05
    %v1179 = vstv %s1178
    %v1180 = vrsqrt.pop %v1179
    %s1181 = vtos %v1180
    %v1182 = vstv %s1181
    %v1183 = vmul.f32 %v1176, %v1182
    %v1184 = vmul.f32 %v1177, %v1182
    %vm1185 = vcmp.ge.f32.partialorder %v1183, 0.0
    %vm1186 = vcmp.ge.f32.partialorder %v1184, 0.0
    %v1187 = vstv %s89
    %v1188 = vmul.f32 %v1187, %v1183
    %v1189 = vmul.f32 %v1187, %v1184
    %v1190 = vsel %vm1185, %v1183, %v1188
    %v1191 = vsel %vm1186, %v1184, %v1189
    %v1192 = vadd.f32 %v1057, %v1059
    %1193 = vadd.xlane.f32.xlu0 %v1192
    %v1194 = vpop.xlane.xlu0 %1193
    %v1195 = vrot.slane %v1194, 4
    %v1196 = vadd.f32 %v1194, %v1195
    %v1197 = vrot.slane %v1196, 2
    %v1198 = vadd.f32 %v1196, %v1197
    %v1199 = vrot.slane %v1198, 1
    %v1200 = vadd.f32 %v1198, %v1199
    %s1201 = vtos %v1200
    %v1202 = vmul.f32 %v1057, %v1057
    %v1203 = vmul.f32 %v1059, %v1059
    %v1204 = vadd.f32 %v1202, %v1203
    %1205 = vadd.xlane.f32.xlu0 %v1204
    %v1206 = vpop.xlane.xlu0 %1205
    %v1207 = vrot.slane %v1206, 4
    %v1208 = vadd.f32 %v1206, %v1207
    %v1209 = vrot.slane %v1208, 2
    %v1210 = vadd.f32 %v1208, %v1209
    %v1211 = vrot.slane %v1210, 1
    %v1212 = vadd.f32 %v1210, %v1211
    %s1213 = vtos %v1212
    %v1214 = vrcp.pop 2048.0
    %s1215 = vtos %v1214
    %s1216 = smul.f32 %s1201, %s1215
    %v1217 = vrcp.pop 2048.0
    %s1218 = vtos %v1217
    %s1219 = smul.f32 %s1213, %s1218
    %s1220 = smul.f32 %s1216, %s1216
    %s1221 = ssub.f32 %s1219, %s1220
    %v1222 = vstv %s1216
    %v1223 = vsub.f32 %v1057, %v1222
    %v1224 = vsub.f32 %v1059, %v1222
    %s1225 = sadd.f32 %s1221, 1e-05
    %v1226 = vstv %s1225
    %v1227 = vrsqrt.pop %v1226
    %s1228 = vtos %v1227
    %v1229 = vstv %s1228
    %v1230 = vmul.f32 %v1223, %v1229
    %v1231 = vmul.f32 %v1224, %v1229
    %vm1232 = vcmp.ge.f32.partialorder %v1230, 0.0
    %vm1233 = vcmp.ge.f32.partialorder %v1231, 0.0
    %v1234 = vmul.f32 %v1187, %v1230
    %v1235 = vmul.f32 %v1187, %v1231
    %v1236 = vsel %vm1232, %v1230, %v1234
    %v1237 = vsel %vm1233, %v1231, %v1235
    %v1238 = vadd.f32 %v1098, %v1100
    %1239 = vadd.xlane.f32.xlu0 %v1238
    %v1240 = vpop.xlane.xlu0 %1239
    %v1241 = vrot.slane %v1240, 4
    %v1242 = vadd.f32 %v1240, %v1241
    %v1243 = vrot.slane %v1242, 2
    %v1244 = vadd.f32 %v1242, %v1243
    %v1245 = vrot.slane %v1244, 1
    %v1246 = vadd.f32 %v1244, %v1245
    %s1247 = vtos %v1246
    %v1248 = vmul.f32 %v1098, %v1098
    %v1249 = vmul.f32 %v1100, %v1100
    %v1250 = vadd.f32 %v1248, %v1249
    %1251 = vadd.xlane.f32.xlu0 %v1250
    %v1252 = vpop.xlane.xlu0 %1251
    %v1253 = vrot.slane %v1252, 4
    %v1254 = vadd.f32 %v1252, %v1253
    %v1255 = vrot.slane %v1254, 2
    %v1256 = vadd.f32 %v1254, %v1255
    %v1257 = vrot.slane %v1256, 1
    %v1258 = vadd.f32 %v1256, %v1257
    %s1259 = vtos %v1258
    %v1260 = vrcp.pop 2048.0
    %s1261 = vtos %v1260
    %s1262 = smul.f32 %s1247, %s1261
    %v1263 = vrcp.pop 2048.0
    %s1264 = vtos %v1263
    %s1265 = smul.f32 %s1259, %s1264
    %s1266 = smul.f32 %s1262, %s1262
    %s1267 = ssub.f32 %s1265, %s1266
    %v1268 = vstv %s1262
    %v1269 = vsub.f32 %v1098, %v1268
    %v1270 = vsub.f32 %v1100, %v1268
    %s1271 = sadd.f32 %s1267, 1e-05
    %v1272 = vstv %s1271
    %v1273 = vrsqrt.pop %v1272
    %s1274 = vtos %v1273
    %v1275 = vstv %s1274
    %v1276 = vmul.f32 %v1269, %v1275
    %v1277 = vmul.f32 %v1270, %v1275
    %vm1278 = vcmp.ge.f32.partialorder %v1276, 0.0
    %vm1279 = vcmp.ge.f32.partialorder %v1277, 0.0
    %v1280 = vmul.f32 %v1187, %v1276
    %v1281 = vmul.f32 %v1187, %v1277
    %v1282 = vsel %vm1278, %v1276, %v1280
    %v1283 = vsel %vm1279, %v1277, %v1281
    %v1284 = vadd.f32 %v1139, %v1141
    %1285 = vadd.xlane.f32.xlu0 %v1284
    %v1286 = vpop.xlane.xlu0 %1285
    %v1287 = vrot.slane %v1286, 4
    %v1288 = vadd.f32 %v1286, %v1287
    %v1289 = vrot.slane %v1288, 2
    %v1290 = vadd.f32 %v1288, %v1289
    %v1291 = vrot.slane %v1290, 1
    %v1292 = vadd.f32 %v1290, %v1291
    %s1293 = vtos %v1292
    %v1294 = vmul.f32 %v1139, %v1139
    %v1295 = vmul.f32 %v1141, %v1141
    %v1296 = vadd.f32 %v1294, %v1295
    %1297 = vadd.xlane.f32.xlu0 %v1296
    %v1298 = vpop.xlane.xlu0 %1297
    %v1299 = vrot.slane %v1298, 4
    %v1300 = vadd.f32 %v1298, %v1299
    %v1301 = vrot.slane %v1300, 2
    %v1302 = vadd.f32 %v1300, %v1301
    %v1303 = vrot.slane %v1302, 1
    %v1304 = vadd.f32 %v1302, %v1303
    %s1305 = vtos %v1304
    %v1306 = vrcp.pop 2048.0
    %s1307 = vtos %v1306
    %s1308 = smul.f32 %s1293, %s1307
    %v1309 = vrcp.pop 2048.0
    %s1310 = vtos %v1309
    %s1311 = smul.f32 %s1305, %s1310
    %s1312 = smul.f32 %s1308, %s1308
    %s1313 = ssub.f32 %s1311, %s1312
    %v1314 = vstv %s1308
    %v1315 = vsub.f32 %v1139, %v1314
    %v1316 = vsub.f32 %v1141, %v1314
    %s1317 = sadd.f32 %s1313, 1e-05
    %v1318 = vstv %s1317
    %v1319 = vrsqrt.pop %v1318
    %s1320 = vtos %v1319
    %v1321 = vstv %s1320
    %v1322 = vmul.f32 %v1315, %v1321
    %v1323 = vmul.f32 %v1316, %v1321
    %vm1324 = vcmp.ge.f32.partialorder %v1322, 0.0
    %vm1325 = vcmp.ge.f32.partialorder %v1323, 0.0
    %v1326 = vmul.f32 %v1187, %v1322
    %v1327 = vmul.f32 %v1187, %v1323
    %v1328 = vsel %vm1324, %v1322, %v1326
    %v1329 = vsel %vm1325, %v1323, %v1327
    %1330 = vst [vmem:[%s9] sm:$0xff] %v1190
    %1331 = vst [vmem:[%s9 + $0x8] sm:$0xff] %v1191
    %1332 = vst [vmem:[%s9 + $0x10] sm:$0xff] %v1236
    %1333 = vst [vmem:[%s9 + $0x18] sm:$0xff] %v1237
    %1334 = vst [vmem:[%s9 + $0x20] sm:$0xff] %v1282
    %1335 = vst [vmem:[%s9 + $0x28] sm:$0xff] %v1283
    %1336 = vst [vmem:[%s9 + $0x30] sm:$0xff] %v1328
    %1337 = vst [vmem:[%s9 + $0x38] sm:$0xff] %v1329
    %v1338 = vpack.c.bf16 %v1190, %v1190
    %v1339 = vpack.c.bf16 %v1191, %v1191
    %v1340 = vpack.c.bf16 %v1236, %v1236
    %v1341 = vpack.c.bf16 %v1237, %v1237
    %v1342 = vpack.c.bf16 %v1282, %v1282
    %v1343 = vpack.c.bf16 %v1283, %v1283
    %v1344 = vpack.c.bf16 %v1328, %v1328
    %v1345 = vpack.c.bf16 %v1329, %v1329
    %v1346 = vld [vmem:[#allocation9] sm:$0xff]
    %v1347 = vld [vmem:[#allocation9 + $0x8] sm:$0xff]
    %v1348 = vld [vmem:[#allocation9 + $0x10] sm:$0xff]
    %v1349 = vld [vmem:[#allocation9 + $0x18] sm:$0xff]
    %v1350 = vld [vmem:[#allocation9 + $0x20] sm:$0xff]
    %v1351 = vld [vmem:[#allocation9 + $0x28] sm:$0xff]
    %v1352 = vld [vmem:[#allocation9 + $0x30] sm:$0xff]
    %v1353 = vld [vmem:[#allocation9 + $0x38] sm:$0xff]
    %v1354 = vld [vmem:[#allocation9 + $0x40] sm:$0xff]
    %v1355 = vld [vmem:[#allocation9 + $0x48] sm:$0xff]
    %v1356 = vld [vmem:[#allocation9 + $0x50] sm:$0xff]
    %v1357 = vld [vmem:[#allocation9 + $0x58] sm:$0xff]
    %v1358 = vld [vmem:[#allocation9 + $0x60] sm:$0xff]
    %v1359 = vld [vmem:[#allocation9 + $0x68] sm:$0xff]
    %v1360 = vld [vmem:[#allocation9 + $0x70] sm:$0xff]
    %v1361 = vld [vmem:[#allocation9 + $0x78] sm:$0xff]
    %v1362 = vld [vmem:[#allocation9 + $0x80] sm:$0xff]
    %v1363 = vld [vmem:[#allocation9 + $0x88] sm:$0xff]
    %v1364 = vld [vmem:[#allocation9 + $0x90] sm:$0xff]
    %v1365 = vld [vmem:[#allocation9 + $0x98] sm:$0xff]
    %v1366 = vld [vmem:[#allocation9 + $0xa0] sm:$0xff]
    %v1367 = vld [vmem:[#allocation9 + $0xa8] sm:$0xff]
    %v1368 = vld [vmem:[#allocation9 + $0xb0] sm:$0xff]
    %v1369 = vld [vmem:[#allocation9 + $0xb8] sm:$0xff]
    %v1370 = vld [vmem:[#allocation9 + $0xc0] sm:$0xff]
    %v1371 = vld [vmem:[#allocation9 + $0xc8] sm:$0xff]
    %v1372 = vld [vmem:[#allocation9 + $0xd0] sm:$0xff]
    %v1373 = vld [vmem:[#allocation9 + $0xd8] sm:$0xff]
    %v1374 = vld [vmem:[#allocation9 + $0xe0] sm:$0xff]
    %v1375 = vld [vmem:[#allocation9 + $0xe8] sm:$0xff]
    %v1376 = vld [vmem:[#allocation9 + $0xf0] sm:$0xff]
    %v1377 = vld [vmem:[#allocation9 + $0xf8] sm:$0xff]
    %v1378 = vld [vmem:[#allocation9 + $0x100] sm:$0xff]
    %v1379 = vld [vmem:[#allocation9 + $0x108] sm:$0xff]
    %v1380 = vld [vmem:[#allocation9 + $0x110] sm:$0xff]
    %v1381 = vld [vmem:[#allocation9 + $0x118] sm:$0xff]
    %v1382 = vld [vmem:[#allocation9 + $0x120] sm:$0xff]
    %v1383 = vld [vmem:[#allocation9 + $0x128] sm:$0xff]
    %v1384 = vld [vmem:[#allocation9 + $0x130] sm:$0xff]
    %v1385 = vld [vmem:[#allocation9 + $0x138] sm:$0xff]
    %v1386 = vld [vmem:[#allocation9 + $0x140] sm:$0xff]
    %v1387 = vld [vmem:[#allocation9 + $0x148] sm:$0xff]
    %v1388 = vld [vmem:[#allocation9 + $0x150] sm:$0xff]
    %v1389 = vld [vmem:[#allocation9 + $0x158] sm:$0xff]
    %v1390 = vld [vmem:[#allocation9 + $0x160] sm:$0xff]
    %v1391 = vld [vmem:[#allocation9 + $0x168] sm:$0xff]
    %v1392 = vld [vmem:[#allocation9 + $0x170] sm:$0xff]
    %v1393 = vld [vmem:[#allocation9 + $0x178] sm:$0xff]
    %v1394 = vld [vmem:[#allocation9 + $0x180] sm:$0xff]
    %v1395 = vld [vmem:[#allocation9 + $0x188] sm:$0xff]
    %v1396 = vld [vmem:[#allocation9 + $0x190] sm:$0xff]
    %v1397 = vld [vmem:[#allocation9 + $0x198] sm:$0xff]
    %v1398 = vld [vmem:[#allocation9 + $0x1a0] sm:$0xff]
    %v1399 = vld [vmem:[#allocation9 + $0x1a8] sm:$0xff]
    %v1400 = vld [vmem:[#allocation9 + $0x1b0] sm:$0xff]
    %v1401 = vld [vmem:[#allocation9 + $0x1b8] sm:$0xff]
    %v1402 = vld [vmem:[#allocation9 + $0x1c0] sm:$0xff]
    %v1403 = vld [vmem:[#allocation9 + $0x1c8] sm:$0xff]
    %v1404 = vld [vmem:[#allocation9 + $0x1d0] sm:$0xff]
    %v1405 = vld [vmem:[#allocation9 + $0x1d8] sm:$0xff]
    %v1406 = vld [vmem:[#allocation9 + $0x1e0] sm:$0xff]
    %v1407 = vld [vmem:[#allocation9 + $0x1e8] sm:$0xff]
    %v1408 = vld [vmem:[#allocation9 + $0x1f0] sm:$0xff]
    %v1409 = vld [vmem:[#allocation9 + $0x1f8] sm:$0xff]
    %v1410 = vld [vmem:[#allocation9 + $0x200] sm:$0xff]
    %v1411 = vld [vmem:[#allocation9 + $0x208] sm:$0xff]
    %v1412 = vld [vmem:[#allocation9 + $0x210] sm:$0xff]
    %v1413 = vld [vmem:[#allocation9 + $0x218] sm:$0xff]
    %v1414 = vld [vmem:[#allocation9 + $0x220] sm:$0xff]
    %v1415 = vld [vmem:[#allocation9 + $0x228] sm:$0xff]
    %v1416 = vld [vmem:[#allocation9 + $0x230] sm:$0xff]
    %v1417 = vld [vmem:[#allocation9 + $0x238] sm:$0xff]
    %v1418 = vld [vmem:[#allocation9 + $0x240] sm:$0xff]
    %v1419 = vld [vmem:[#allocation9 + $0x248] sm:$0xff]
    %v1420 = vld [vmem:[#allocation9 + $0x250] sm:$0xff]
    %v1421 = vld [vmem:[#allocation9 + $0x258] sm:$0xff]
    %v1422 = vld [vmem:[#allocation9 + $0x260] sm:$0xff]
    %v1423 = vld [vmem:[#allocation9 + $0x268] sm:$0xff]
    %v1424 = vld [vmem:[#allocation9 + $0x270] sm:$0xff]
    %v1425 = vld [vmem:[#allocation9 + $0x278] sm:$0xff]
    %v1426 = vld [vmem:[#allocation9 + $0x280] sm:$0xff]
    %v1427 = vld [vmem:[#allocation9 + $0x288] sm:$0xff]
    %v1428 = vld [vmem:[#allocation9 + $0x290] sm:$0xff]
    %v1429 = vld [vmem:[#allocation9 + $0x298] sm:$0xff]
    %v1430 = vld [vmem:[#allocation9 + $0x2a0] sm:$0xff]
    %v1431 = vld [vmem:[#allocation9 + $0x2a8] sm:$0xff]
    %v1432 = vld [vmem:[#allocation9 + $0x2b0] sm:$0xff]
    %v1433 = vld [vmem:[#allocation9 + $0x2b8] sm:$0xff]
    %v1434 = vld [vmem:[#allocation9 + $0x2c0] sm:$0xff]
    %v1435 = vld [vmem:[#allocation9 + $0x2c8] sm:$0xff]
    %v1436 = vld [vmem:[#allocation9 + $0x2d0] sm:$0xff]
    %v1437 = vld [vmem:[#allocation9 + $0x2d8] sm:$0xff]
    %v1438 = vld [vmem:[#allocation9 + $0x2e0] sm:$0xff]
    %v1439 = vld [vmem:[#allocation9 + $0x2e8] sm:$0xff]
    %v1440 = vld [vmem:[#allocation9 + $0x2f0] sm:$0xff]
    %v1441 = vld [vmem:[#allocation9 + $0x2f8] sm:$0xff]
    %v1442 = vld [vmem:[#allocation9 + $0x300] sm:$0xff]
    %v1443 = vld [vmem:[#allocation9 + $0x308] sm:$0xff]
    %v1444 = vld [vmem:[#allocation9 + $0x310] sm:$0xff]
    %v1445 = vld [vmem:[#allocation9 + $0x318] sm:$0xff]
    %v1446 = vld [vmem:[#allocation9 + $0x320] sm:$0xff]
    %v1447 = vld [vmem:[#allocation9 + $0x328] sm:$0xff]
    %v1448 = vld [vmem:[#allocation9 + $0x330] sm:$0xff]
    %v1449 = vld [vmem:[#allocation9 + $0x338] sm:$0xff]
    %v1450 = vld [vmem:[#allocation9 + $0x340] sm:$0xff]
    %v1451 = vld [vmem:[#allocation9 + $0x348] sm:$0xff]
    %v1452 = vld [vmem:[#allocation9 + $0x350] sm:$0xff]
    %v1453 = vld [vmem:[#allocation9 + $0x358] sm:$0xff]
    %v1454 = vld [vmem:[#allocation9 + $0x360] sm:$0xff]
    %v1455 = vld [vmem:[#allocation9 + $0x368] sm:$0xff]
    %v1456 = vld [vmem:[#allocation9 + $0x370] sm:$0xff]
    %v1457 = vld [vmem:[#allocation9 + $0x378] sm:$0xff]
    %v1458 = vld [vmem:[#allocation9 + $0x380] sm:$0xff]
    %v1459 = vld [vmem:[#allocation9 + $0x388] sm:$0xff]
    %v1460 = vld [vmem:[#allocation9 + $0x390] sm:$0xff]
    %v1461 = vld [vmem:[#allocation9 + $0x398] sm:$0xff]
    %v1462 = vld [vmem:[#allocation9 + $0x3a0] sm:$0xff]
    %v1463 = vld [vmem:[#allocation9 + $0x3a8] sm:$0xff]
    %v1464 = vld [vmem:[#allocation9 + $0x3b0] sm:$0xff]
    %v1465 = vld [vmem:[#allocation9 + $0x3b8] sm:$0xff]
    %v1466 = vld [vmem:[#allocation9 + $0x3c0] sm:$0xff]
    %v1467 = vld [vmem:[#allocation9 + $0x3c8] sm:$0xff]
    %v1468 = vld [vmem:[#allocation9 + $0x3d0] sm:$0xff]
    %v1469 = vld [vmem:[#allocation9 + $0x3d8] sm:$0xff]
    %v1470 = vld [vmem:[#allocation9 + $0x3e0] sm:$0xff]
    %v1471 = vld [vmem:[#allocation9 + $0x3e8] sm:$0xff]
    %v1472 = vld [vmem:[#allocation9 + $0x3f0] sm:$0xff]
    %v1473 = vld [vmem:[#allocation9 + $0x3f8] sm:$0xff]
    %v1474 = vld [vmem:[%s8] sm:$0x3]
    %v1476 = vlaneseq
    %v1477 = vshrl.u32 %v1476, 7
    %v1478 = vsub.s32 0, %v1477
    %v1479 = vrot.slane %v1474, %v1478
    %v1480 = vlaneseq
    %v1481 = vshrl.u32 %v1480, 7
    %v1482 = vsub.s32 1, %v1481
    %v1483 = vrot.slane %v1474, %v1482
    %v1614 = vunpack.c.l.b16 %v1346
    %v1615 = vunpack.c.h.b16 %v1346
    %v1616 = vunpack.c.l.b16 %v1347
    %v1617 = vunpack.c.h.b16 %v1347
    %v1618 = vunpack.c.l.b16 %v1348
    %v1619 = vunpack.c.h.b16 %v1348
    %v1620 = vunpack.c.l.b16 %v1349
    %v1621 = vunpack.c.h.b16 %v1349
    %v1622 = vunpack.c.l.b16 %v1350
    %v1623 = vunpack.c.h.b16 %v1350
    %v1624 = vunpack.c.l.b16 %v1351
    %v1625 = vunpack.c.h.b16 %v1351
    %v1626 = vunpack.c.l.b16 %v1352
    %v1627 = vunpack.c.h.b16 %v1352
    %v1628 = vunpack.c.l.b16 %v1353
    %v1629 = vunpack.c.h.b16 %v1353
    %v1630 = vunpack.c.l.b16 %v1354
    %v1631 = vunpack.c.h.b16 %v1354
    %v1632 = vunpack.c.l.b16 %v1355
    %v1633 = vunpack.c.h.b16 %v1355
    %v1634 = vunpack.c.l.b16 %v1356
    %v1635 = vunpack.c.h.b16 %v1356
    %v1636 = vunpack.c.l.b16 %v1357
    %v1637 = vunpack.c.h.b16 %v1357
    %v1638 = vunpack.c.l.b16 %v1358
    %v1639 = vunpack.c.h.b16 %v1358
    %v1640 = vunpack.c.l.b16 %v1359
    %v1641 = vunpack.c.h.b16 %v1359
    %v1642 = vunpack.c.l.b16 %v1360
    %v1643 = vunpack.c.h.b16 %v1360
    %v1644 = vunpack.c.l.b16 %v1361
    %v1645 = vunpack.c.h.b16 %v1361
    %v1646 = vunpack.c.l.b16 %v1362
    %v1647 = vunpack.c.h.b16 %v1362
    %v1648 = vunpack.c.l.b16 %v1363
    %v1649 = vunpack.c.h.b16 %v1363
    %v1650 = vunpack.c.l.b16 %v1364
    %v1651 = vunpack.c.h.b16 %v1364
    %v1652 = vunpack.c.l.b16 %v1365
    %v1653 = vunpack.c.h.b16 %v1365
    %v1654 = vunpack.c.l.b16 %v1366
    %v1655 = vunpack.c.h.b16 %v1366
    %v1656 = vunpack.c.l.b16 %v1367
    %v1657 = vunpack.c.h.b16 %v1367
    %v1658 = vunpack.c.l.b16 %v1368
    %v1659 = vunpack.c.h.b16 %v1368
    %v1660 = vunpack.c.l.b16 %v1369
    %v1661 = vunpack.c.h.b16 %v1369
    %v1662 = vunpack.c.l.b16 %v1370
    %v1663 = vunpack.c.h.b16 %v1370
    %v1664 = vunpack.c.l.b16 %v1371
    %v1665 = vunpack.c.h.b16 %v1371
    %v1666 = vunpack.c.l.b16 %v1372
    %v1667 = vunpack.c.h.b16 %v1372
    %v1668 = vunpack.c.l.b16 %v1373
    %v1669 = vunpack.c.h.b16 %v1373
    %v1670 = vunpack.c.l.b16 %v1374
    %v1671 = vunpack.c.h.b16 %v1374
    %v1672 = vunpack.c.l.b16 %v1375
    %v1673 = vunpack.c.h.b16 %v1375
    %v1674 = vunpack.c.l.b16 %v1376
    %v1675 = vunpack.c.h.b16 %v1376
    %v1676 = vunpack.c.l.b16 %v1377
    %v1677 = vunpack.c.h.b16 %v1377
    %v1678 = vunpack.c.l.b16 %v1378
    %v1679 = vunpack.c.h.b16 %v1378
    %v1680 = vunpack.c.l.b16 %v1379
    %v1681 = vunpack.c.h.b16 %v1379
    %v1682 = vunpack.c.l.b16 %v1380
    %v1683 = vunpack.c.h.b16 %v1380
    %v1684 = vunpack.c.l.b16 %v1381
    %v1685 = vunpack.c.h.b16 %v1381
    %v1686 = vunpack.c.l.b16 %v1382
    %v1687 = vunpack.c.h.b16 %v1382
    %v1688 = vunpack.c.l.b16 %v1383
    %v1689 = vunpack.c.h.b16 %v1383
    %v1690 = vunpack.c.l.b16 %v1384
    %v1691 = vunpack.c.h.b16 %v1384
    %v1692 = vunpack.c.l.b16 %v1385
    %v1693 = vunpack.c.h.b16 %v1385
    %v1694 = vunpack.c.l.b16 %v1386
    %v1695 = vunpack.c.h.b16 %v1386
    %v1696 = vunpack.c.l.b16 %v1387
    %v1697 = vunpack.c.h.b16 %v1387
    %v1698 = vunpack.c.l.b16 %v1388
    %v1699 = vunpack.c.h.b16 %v1388
    %v1700 = vunpack.c.l.b16 %v1389
    %v1701 = vunpack.c.h.b16 %v1389
    %v1702 = vunpack.c.l.b16 %v1390
    %v1703 = vunpack.c.h.b16 %v1390
    %v1704 = vunpack.c.l.b16 %v1391
    %v1705 = vunpack.c.h.b16 %v1391
    %v1706 = vunpack.c.l.b16 %v1392
    %v1707 = vunpack.c.h.b16 %v1392
    %v1708 = vunpack.c.l.b16 %v1393
    %v1709 = vunpack.c.h.b16 %v1393
    %v1710 = vunpack.c.l.b16 %v1394
    %v1711 = vunpack.c.h.b16 %v1394
    %v1712 = vunpack.c.l.b16 %v1395
    %v1713 = vunpack.c.h.b16 %v1395
    %v1714 = vunpack.c.l.b16 %v1396
    %v1715 = vunpack.c.h.b16 %v1396
    %v1716 = vunpack.c.l.b16 %v1397
    %v1717 = vunpack.c.h.b16 %v1397
    %v1718 = vunpack.c.l.b16 %v1398
    %v1719 = vunpack.c.h.b16 %v1398
    %v1720 = vunpack.c.l.b16 %v1399
    %v1721 = vunpack.c.h.b16 %v1399
    %v1722 = vunpack.c.l.b16 %v1400
    %v1723 = vunpack.c.h.b16 %v1400
    %v1724 = vunpack.c.l.b16 %v1401
    %v1725 = vunpack.c.h.b16 %v1401
    %v1726 = vunpack.c.l.b16 %v1402
    %v1727 = vunpack.c.h.b16 %v1402
    %v1728 = vunpack.c.l.b16 %v1403
    %v1729 = vunpack.c.h.b16 %v1403
    %v1730 = vunpack.c.l.b16 %v1404
    %v1731 = vunpack.c.h.b16 %v1404
    %v1732 = vunpack.c.l.b16 %v1405
    %v1733 = vunpack.c.h.b16 %v1405
    %v1734 = vunpack.c.l.b16 %v1406
    %v1735 = vunpack.c.h.b16 %v1406
    %v1736 = vunpack.c.l.b16 %v1407
    %v1737 = vunpack.c.h.b16 %v1407
    %v1738 = vunpack.c.l.b16 %v1408
    %v1739 = vunpack.c.h.b16 %v1408
    %v1740 = vunpack.c.l.b16 %v1409
    %v1741 = vunpack.c.h.b16 %v1409
    %v1742 = vunpack.c.l.b16 %v1410
    %v1743 = vunpack.c.h.b16 %v1410
    %v1744 = vunpack.c.l.b16 %v1411
    %v1745 = vunpack.c.h.b16 %v1411
    %v1746 = vunpack.c.l.b16 %v1412
    %v1747 = vunpack.c.h.b16 %v1412
    %v1748 = vunpack.c.l.b16 %v1413
    %v1749 = vunpack.c.h.b16 %v1413
    %v1750 = vunpack.c.l.b16 %v1414
    %v1751 = vunpack.c.h.b16 %v1414
    %v1752 = vunpack.c.l.b16 %v1415
    %v1753 = vunpack.c.h.b16 %v1415
    %v1754 = vunpack.c.l.b16 %v1416
    %v1755 = vunpack.c.h.b16 %v1416
    %v1756 = vunpack.c.l.b16 %v1417
    %v1757 = vunpack.c.h.b16 %v1417
    %v1758 = vunpack.c.l.b16 %v1418
    %v1759 = vunpack.c.h.b16 %v1418
    %v1760 = vunpack.c.l.b16 %v1419
    %v1761 = vunpack.c.h.b16 %v1419
    %v1762 = vunpack.c.l.b16 %v1420
    %v1763 = vunpack.c.h.b16 %v1420
    %v1764 = vunpack.c.l.b16 %v1421
    %v1765 = vunpack.c.h.b16 %v1421
    %v1766 = vunpack.c.l.b16 %v1422
    %v1767 = vunpack.c.h.b16 %v1422
    %v1768 = vunpack.c.l.b16 %v1423
    %v1769 = vunpack.c.h.b16 %v1423
    %v1770 = vunpack.c.l.b16 %v1424
    %v1771 = vunpack.c.h.b16 %v1424
    %v1772 = vunpack.c.l.b16 %v1425
    %v1773 = vunpack.c.h.b16 %v1425
    %v1774 = vunpack.c.l.b16 %v1426
    %v1775 = vunpack.c.h.b16 %v1426
    %v1776 = vunpack.c.l.b16 %v1427
    %v1777 = vunpack.c.h.b16 %v1427
    %v1778 = vunpack.c.l.b16 %v1428
    %v1779 = vunpack.c.h.b16 %v1428
    %v1780 = vunpack.c.l.b16 %v1429
    %v1781 = vunpack.c.h.b16 %v1429
    %v1782 = vunpack.c.l.b16 %v1430
    %v1783 = vunpack.c.h.b16 %v1430
    %v1784 = vunpack.c.l.b16 %v1431
    %v1785 = vunpack.c.h.b16 %v1431
    %v1786 = vunpack.c.l.b16 %v1432
    %v1787 = vunpack.c.h.b16 %v1432
    %v1788 = vunpack.c.l.b16 %v1433
    %v1789 = vunpack.c.h.b16 %v1433
    %v1790 = vunpack.c.l.b16 %v1434
    %v1791 = vunpack.c.h.b16 %v1434
    %v1792 = vunpack.c.l.b16 %v1435
    %v1793 = vunpack.c.h.b16 %v1435
    %v1794 = vunpack.c.l.b16 %v1436
    %v1795 = vunpack.c.h.b16 %v1436
    %v1796 = vunpack.c.l.b16 %v1437
    %v1797 = vunpack.c.h.b16 %v1437
    %v1798 = vunpack.c.l.b16 %v1438
    %v1799 = vunpack.c.h.b16 %v1438
    %v1800 = vunpack.c.l.b16 %v1439
    %v1801 = vunpack.c.h.b16 %v1439
    %v1802 = vunpack.c.l.b16 %v1440
    %v1803 = vunpack.c.h.b16 %v1440
    %v1804 = vunpack.c.l.b16 %v1441
    %v1805 = vunpack.c.h.b16 %v1441
    %v1806 = vunpack.c.l.b16 %v1442
    %v1807 = vunpack.c.h.b16 %v1442
    %v1808 = vunpack.c.l.b16 %v1443
    %v1809 = vunpack.c.h.b16 %v1443
    %v1810 = vunpack.c.l.b16 %v1444
    %v1811 = vunpack.c.h.b16 %v1444
    %v1812 = vunpack.c.l.b16 %v1445
    %v1813 = vunpack.c.h.b16 %v1445
    %v1814 = vunpack.c.l.b16 %v1446
    %v1815 = vunpack.c.h.b16 %v1446
    %v1816 = vunpack.c.l.b16 %v1447
    %v1817 = vunpack.c.h.b16 %v1447
    %v1818 = vunpack.c.l.b16 %v1448
    %v1819 = vunpack.c.h.b16 %v1448
    %v1820 = vunpack.c.l.b16 %v1449
    %v1821 = vunpack.c.h.b16 %v1449
    %v1822 = vunpack.c.l.b16 %v1450
    %v1823 = vunpack.c.h.b16 %v1450
    %v1824 = vunpack.c.l.b16 %v1451
    %v1825 = vunpack.c.h.b16 %v1451
    %v1826 = vunpack.c.l.b16 %v1452
    %v1827 = vunpack.c.h.b16 %v1452
    %v1828 = vunpack.c.l.b16 %v1453
    %v1829 = vunpack.c.h.b16 %v1453
    %v1830 = vunpack.c.l.b16 %v1454
    %v1831 = vunpack.c.h.b16 %v1454
    %v1832 = vunpack.c.l.b16 %v1455
    %v1833 = vunpack.c.h.b16 %v1455
    %v1834 = vunpack.c.l.b16 %v1456
    %v1835 = vunpack.c.h.b16 %v1456
    %v1836 = vunpack.c.l.b16 %v1457
    %v1837 = vunpack.c.h.b16 %v1457
    %v1838 = vunpack.c.l.b16 %v1458
    %v1839 = vunpack.c.h.b16 %v1458
    %v1840 = vunpack.c.l.b16 %v1459
    %v1841 = vunpack.c.h.b16 %v1459
    %v1842 = vunpack.c.l.b16 %v1460
    %v1843 = vunpack.c.h.b16 %v1460
    %v1844 = vunpack.c.l.b16 %v1461
    %v1845 = vunpack.c.h.b16 %v1461
    %v1846 = vunpack.c.l.b16 %v1462
    %v1847 = vunpack.c.h.b16 %v1462
    %v1848 = vunpack.c.l.b16 %v1463
    %v1849 = vunpack.c.h.b16 %v1463
    %v1850 = vunpack.c.l.b16 %v1464
    %v1851 = vunpack.c.h.b16 %v1464
    %v1852 = vunpack.c.l.b16 %v1465
    %v1853 = vunpack.c.h.b16 %v1465
    %v1854 = vunpack.c.l.b16 %v1466
    %v1855 = vunpack.c.h.b16 %v1466
    %v1856 = vunpack.c.l.b16 %v1467
    %v1857 = vunpack.c.h.b16 %v1467
    %v1858 = vunpack.c.l.b16 %v1468
    %v1859 = vunpack.c.h.b16 %v1468
    %v1860 = vunpack.c.l.b16 %v1469
    %v1861 = vunpack.c.h.b16 %v1469
    %v1862 = vunpack.c.l.b16 %v1470
    %v1863 = vunpack.c.h.b16 %v1470
    %v1864 = vunpack.c.l.b16 %v1471
    %v1865 = vunpack.c.h.b16 %v1471
    %v1866 = vunpack.c.l.b16 %v1472
    %v1867 = vunpack.c.h.b16 %v1472
    %v1868 = vunpack.c.l.b16 %v1473
    %v1869 = vunpack.c.h.b16 %v1473
    %v1870 = vpack.c.b16 %v1616, %v1614
    %v1871 = vpack.c.b16 %v1617, %v1615
    %v1872 = vpack.c.b16 %v1620, %v1618
    %v1873 = vpack.c.b16 %v1621, %v1619
    %v1874 = vpack.c.b16 %v1624, %v1622
    %v1875 = vpack.c.b16 %v1625, %v1623
    %v1876 = vpack.c.b16 %v1628, %v1626
    %v1877 = vpack.c.b16 %v1629, %v1627
    %v1878 = vpack.c.b16 %v1632, %v1630
    %v1879 = vpack.c.b16 %v1633, %v1631
    %v1880 = vpack.c.b16 %v1636, %v1634
    %v1881 = vpack.c.b16 %v1637, %v1635
    %v1882 = vpack.c.b16 %v1640, %v1638
    %v1883 = vpack.c.b16 %v1641, %v1639
    %v1884 = vpack.c.b16 %v1644, %v1642
    %v1885 = vpack.c.b16 %v1645, %v1643
    %v1886 = vpack.c.b16 %v1648, %v1646
    %v1887 = vpack.c.b16 %v1649, %v1647
    %v1888 = vpack.c.b16 %v1652, %v1650
    %v1889 = vpack.c.b16 %v1653, %v1651
    %v1890 = vpack.c.b16 %v1656, %v1654
    %v1891 = vpack.c.b16 %v1657, %v1655
    %v1892 = vpack.c.b16 %v1660, %v1658
    %v1893 = vpack.c.b16 %v1661, %v1659
    %v1894 = vpack.c.b16 %v1664, %v1662
    %v1895 = vpack.c.b16 %v1665, %v1663
    %v1896 = vpack.c.b16 %v1668, %v1666
    %v1897 = vpack.c.b16 %v1669, %v1667
    %v1898 = vpack.c.b16 %v1672, %v1670
    %v1899 = vpack.c.b16 %v1673, %v1671
    %v1900 = vpack.c.b16 %v1676, %v1674
    %v1901 = vpack.c.b16 %v1677, %v1675
    %v1902 = vpack.c.b16 %v1680, %v1678
    %v1903 = vpack.c.b16 %v1681, %v1679
    %v1904 = vpack.c.b16 %v1684, %v1682
    %v1905 = vpack.c.b16 %v1685, %v1683
    %v1906 = vpack.c.b16 %v1688, %v1686
    %v1907 = vpack.c.b16 %v1689, %v1687
    %v1908 = vpack.c.b16 %v1692, %v1690
    %v1909 = vpack.c.b16 %v1693, %v1691
    %v1910 = vpack.c.b16 %v1696, %v1694
    %v1911 = vpack.c.b16 %v1697, %v1695
    %v1912 = vpack.c.b16 %v1700, %v1698
    %v1913 = vpack.c.b16 %v1701, %v1699
    %v1914 = vpack.c.b16 %v1704, %v1702
    %v1915 = vpack.c.b16 %v1705, %v1703
    %v1916 = vpack.c.b16 %v1708, %v1706
    %v1917 = vpack.c.b16 %v1709, %v1707
    %v1918 = vpack.c.b16 %v1712, %v1710
    %v1919 = vpack.c.b16 %v1713, %v1711
    %v1920 = vpack.c.b16 %v1716, %v1714
    %v1921 = vpack.c.b16 %v1717, %v1715
    %v1922 = vpack.c.b16 %v1720, %v1718
    %v1923 = vpack.c.b16 %v1721, %v1719
    %v1924 = vpack.c.b16 %v1724, %v1722
    %v1925 = vpack.c.b16 %v1725, %v1723
    %v1926 = vpack.c.b16 %v1728, %v1726
    %v1927 = vpack.c.b16 %v1729, %v1727
    %v1928 = vpack.c.b16 %v1732, %v1730
    %v1929 = vpack.c.b16 %v1733, %v1731
    %v1930 = vpack.c.b16 %v1736, %v1734
    %v1931 = vpack.c.b16 %v1737, %v1735
    %v1932 = vpack.c.b16 %v1740, %v1738
    %v1933 = vpack.c.b16 %v1741, %v1739
    %v1934 = vpack.c.b16 %v1744, %v1742
    %v1935 = vpack.c.b16 %v1745, %v1743
    %v1936 = vpack.c.b16 %v1748, %v1746
    %v1937 = vpack.c.b16 %v1749, %v1747
    %v1938 = vpack.c.b16 %v1752, %v1750
    %v1939 = vpack.c.b16 %v1753, %v1751
    %v1940 = vpack.c.b16 %v1756, %v1754
    %v1941 = vpack.c.b16 %v1757, %v1755
    %v1942 = vpack.c.b16 %v1760, %v1758
    %v1943 = vpack.c.b16 %v1761, %v1759
    %v1944 = vpack.c.b16 %v1764, %v1762
    %v1945 = vpack.c.b16 %v1765, %v1763
    %v1946 = vpack.c.b16 %v1768, %v1766
    %v1947 = vpack.c.b16 %v1769, %v1767
    %v1948 = vpack.c.b16 %v1772, %v1770
    %v1949 = vpack.c.b16 %v1773, %v1771
    %v1950 = vpack.c.b16 %v1776, %v1774
    %v1951 = vpack.c.b16 %v1777, %v1775
    %v1952 = vpack.c.b16 %v1780, %v1778
    %v1953 = vpack.c.b16 %v1781, %v1779
    %v1954 = vpack.c.b16 %v1784, %v1782
    %v1955 = vpack.c.b16 %v1785, %v1783
    %v1956 = vpack.c.b16 %v1788, %v1786
    %v1957 = vpack.c.b16 %v1789, %v1787
    %v1958 = vpack.c.b16 %v1792, %v1790
    %v1959 = vpack.c.b16 %v1793, %v1791
    %v1960 = vpack.c.b16 %v1796, %v1794
    %v1961 = vpack.c.b16 %v1797, %v1795
    %v1962 = vpack.c.b16 %v1800, %v1798
    %v1963 = vpack.c.b16 %v1801, %v1799
    %v1964 = vpack.c.b16 %v1804, %v1802
    %v1965 = vpack.c.b16 %v1805, %v1803
    %v1966 = vpack.c.b16 %v1808, %v1806
    %v1967 = vpack.c.b16 %v1809, %v1807
    %v1968 = vpack.c.b16 %v1812, %v1810
    %v1969 = vpack.c.b16 %v1813, %v1811
    %v1970 = vpack.c.b16 %v1816, %v1814
    %v1971 = vpack.c.b16 %v1817, %v1815
    %v1972 = vpack.c.b16 %v1820, %v1818
    %v1973 = vpack.c.b16 %v1821, %v1819
    %v1974 = vpack.c.b16 %v1824, %v1822
    %v1975 = vpack.c.b16 %v1825, %v1823
    %v1976 = vpack.c.b16 %v1828, %v1826
    %v1977 = vpack.c.b16 %v1829, %v1827
    %v1978 = vpack.c.b16 %v1832, %v1830
    %v1979 = vpack.c.b16 %v1833, %v1831
    %v1980 = vpack.c.b16 %v1836, %v1834
    %v1981 = vpack.c.b16 %v1837, %v1835
    %v1982 = vpack.c.b16 %v1840, %v1838
    %v1983 = vpack.c.b16 %v1841, %v1839
    %v1984 = vpack.c.b16 %v1844, %v1842
    %v1985 = vpack.c.b16 %v1845, %v1843
    %v1986 = vpack.c.b16 %v1848, %v1846
    %v1987 = vpack.c.b16 %v1849, %v1847
    %v1988 = vpack.c.b16 %v1852, %v1850
    %v1989 = vpack.c.b16 %v1853, %v1851
    %v1990 = vpack.c.b16 %v1856, %v1854
    %v1991 = vpack.c.b16 %v1857, %v1855
    %v1992 = vpack.c.b16 %v1860, %v1858
    %v1993 = vpack.c.b16 %v1861, %v1859
    %v1994 = vpack.c.b16 %v1864, %v1862
    %v1995 = vpack.c.b16 %v1865, %v1863
    %v1996 = vpack.c.b16 %v1868, %v1866
    %v1997 = vpack.c.b16 %v1869, %v1867
    %2126 = vmatprep.subr.bf16.mxu0 %v1871
    %2127 = vmatpush1.bf16.msra.mxu0 %v1870
    %2128 = vmatprep.subr.bf16.mxu0 %v1873
    %2129 = vmatpush1.bf16.msra.mxu0 %v1872
    %2130 = vmatprep.subr.bf16.mxu0 %v1875
    %2131 = vmatpush1.bf16.msra.mxu0 %v1874
    %2132 = vmatprep.subr.bf16.mxu0 %v1877
    %2133 = vmatpush1.bf16.msra.mxu0 %v1876
    %2134 = vmatprep.subr.bf16.mxu0 %v1879
    %2135 = vmatpush1.bf16.msra.mxu0 %v1878
    %2136 = vmatprep.subr.bf16.mxu0 %v1881
    %2137 = vmatpush1.bf16.msra.mxu0 %v1880
    %2138 = vmatprep.subr.bf16.mxu0 %v1883
    %2139 = vmatpush1.bf16.msra.mxu0 %v1882
    %2140 = vmatprep.subr.bf16.mxu0 %v1885
    %2141 = vmatpush1.bf16.msra.mxu0 %v1884
    %2142 = vmatprep.subr.bf16.mxu0 %v1887
    %2143 = vmatpush1.bf16.msra.mxu0 %v1886
    %2144 = vmatprep.subr.bf16.mxu0 %v1889
    %2145 = vmatpush1.bf16.msra.mxu0 %v1888
    %2146 = vmatprep.subr.bf16.mxu0 %v1891
    %2147 = vmatpush1.bf16.msra.mxu0 %v1890
    %2148 = vmatprep.subr.bf16.mxu0 %v1893
    %2149 = vmatpush1.bf16.msra.mxu0 %v1892
    %2150 = vmatprep.subr.bf16.mxu0 %v1895
    %2151 = vmatpush1.bf16.msra.mxu0 %v1894
    %2152 = vmatprep.subr.bf16.mxu0 %v1897
    %2153 = vmatpush1.bf16.msra.mxu0 %v1896
    %2154 = vmatprep.subr.bf16.mxu0 %v1899
    %2155 = vmatpush1.bf16.msra.mxu0 %v1898
    %2156 = vmatprep.subr.bf16.mxu0 %v1901
    %2157 = vmatpush1.bf16.msra.mxu0 %v1900
    %2158 = vmatprep.mubr.bf16.mxu0 %v1339
    %2159 = vmatmul.mubr.bf16.gmra.mrb[0].mxu0 %v1338
    %v2160 = vpop.f32.mrb[0].mxu0
    %v2161 = vadd.f32 %v1479, %v2160
    %v2162 = vpop.f32.mrb[0].mxu0
    %v2163 = vadd.f32 %v1483, %v2162
    %v2164 = vpop.f32.mrb[0].mxu0
    %v2165 = vpop.f32.mrb[0].mxu0
    %2166 = vdwg.mxu0
    %2167 = vmatprep.subr.bf16.mxu0 %v1903
    %2168 = vmatpush1.bf16.msra.mxu0 %v1902
    %2169 = vmatprep.subr.bf16.mxu0 %v1905
    %2170 = vmatpush1.bf16.msra.mxu0 %v1904
    %2171 = vmatprep.subr.bf16.mxu0 %v1907
    %2172 = vmatpush1.bf16.msra.mxu0 %v1906
    %2173 = vmatprep.subr.bf16.mxu0 %v1909
    %2174 = vmatpush1.bf16.msra.mxu0 %v1908
    %2175 = vmatprep.subr.bf16.mxu0 %v1911
    %2176 = vmatpush1.bf16.msra.mxu0 %v1910
    %2177 = vmatprep.subr.bf16.mxu0 %v1913
    %2178 = vmatpush1.bf16.msra.mxu0 %v1912
    %2179 = vmatprep.subr.bf16.mxu0 %v1915
    %2180 = vmatpush1.bf16.msra.mxu0 %v1914
    %2181 = vmatprep.subr.bf16.mxu0 %v1917
    %2182 = vmatpush1.bf16.msra.mxu0 %v1916
    %2183 = vmatprep.subr.bf16.mxu0 %v1919
    %2184 = vmatpush1.bf16.msra.mxu0 %v1918
    %2185 = vmatprep.subr.bf16.mxu0 %v1921
    %2186 = vmatpush1.bf16.msra.mxu0 %v1920
    %2187 = vmatprep.subr.bf16.mxu0 %v1923
    %2188 = vmatpush1.bf16.msra.mxu0 %v1922
    %2189 = vmatprep.subr.bf16.mxu0 %v1925
    %2190 = vmatpush1.bf16.msra.mxu0 %v1924
    %2191 = vmatprep.subr.bf16.mxu0 %v1927
    %2192 = vmatpush1.bf16.msra.mxu0 %v1926
    %2193 = vmatprep.subr.bf16.mxu0 %v1929
    %2194 = vmatpush1.bf16.msra.mxu0 %v1928
    %2195 = vmatprep.subr.bf16.mxu0 %v1931
    %2196 = vmatpush1.bf16.msra.mxu0 %v1930
    %2197 = vmatprep.subr.bf16.mxu0 %v1933
    %2198 = vmatpush1.bf16.msra.mxu0 %v1932
    %2199 = vmatprep.mubr.bf16.mxu0 %v1341
    %2200 = vmatmul.mubr.bf16.gmra.mrb[0].mxu0 %v1340
    %v2201 = vpop.f32.mrb[0].mxu0
    %v2202 = vadd.f32 %v2161, %v2201
    %v2203 = vpop.f32.mrb[0].mxu0
    %v2204 = vadd.f32 %v2163, %v2203
    %v2205 = vpop.f32.mrb[0].mxu0
    %v2206 = vpop.f32.mrb[0].mxu0
    %2207 = vdwg.mxu0
    %2208 = vmatprep.subr.bf16.mxu0 %v1935
    %2209 = vmatpush1.bf16.msra.mxu0 %v1934
    %2210 = vmatprep.subr.bf16.mxu0 %v1937
    %2211 = vmatpush1.bf16.msra.mxu0 %v1936
    %2212 = vmatprep.subr.bf16.mxu0 %v1939
    %2213 = vmatpush1.bf16.msra.mxu0 %v1938
    %2214 = vmatprep.subr.bf16.mxu0 %v1941
    %2215 = vmatpush1.bf16.msra.mxu0 %v1940
    %2216 = vmatprep.subr.bf16.mxu0 %v1943
    %2217 = vmatpush1.bf16.msra.mxu0 %v1942
    %2218 = vmatprep.subr.bf16.mxu0 %v1945
    %2219 = vmatpush1.bf16.msra.mxu0 %v1944
    %2220 = vmatprep.subr.bf16.mxu0 %v1947
    %2221 = vmatpush1.bf16.msra.mxu0 %v1946
    %2222 = vmatprep.subr.bf16.mxu0 %v1949
    %2223 = vmatpush1.bf16.msra.mxu0 %v1948
    %2224 = vmatprep.subr.bf16.mxu0 %v1951
    %2225 = vmatpush1.bf16.msra.mxu0 %v1950
    %2226 = vmatprep.subr.bf16.mxu0 %v1953
    %2227 = vmatpush1.bf16.msra.mxu0 %v1952
    %2228 = vmatprep.subr.bf16.mxu0 %v1955
    %2229 = vmatpush1.bf16.msra.mxu0 %v1954
    %2230 = vmatprep.subr.bf16.mxu0 %v1957
    %2231 = vmatpush1.bf16.msra.mxu0 %v1956
    %2232 = vmatprep.subr.bf16.mxu0 %v1959
    %2233 = vmatpush1.bf16.msra.mxu0 %v1958
    %2234 = vmatprep.subr.bf16.mxu0 %v1961
    %2235 = vmatpush1.bf16.msra.mxu0 %v1960
    %2236 = vmatprep.subr.bf16.mxu0 %v1963
    %2237 = vmatpush1.bf16.msra.mxu0 %v1962
    %2238 = vmatprep.subr.bf16.mxu0 %v1965
    %2239 = vmatpush1.bf16.msra.mxu0 %v1964
    %2240 = vmatprep.mubr.bf16.mxu0 %v1343
    %2241 = vmatmul.mubr.bf16.gmra.mrb[0].mxu0 %v1342
    %v2242 = vpop.f32.mrb[0].mxu0
    %v2243 = vadd.f32 %v2202, %v2242
    %v2244 = vpop.f32.mrb[0].mxu0
    %v2245 = vadd.f32 %v2204, %v2244
    %v2246 = vpop.f32.mrb[0].mxu0
    %v2247 = vpop.f32.mrb[0].mxu0
    %2248 = vdwg.mxu0
    %2249 = vmatprep.subr.bf16.mxu0 %v1967
    %2250 = vmatpush1.bf16.msra.mxu0 %v1966
    %2251 = vmatprep.subr.bf16.mxu0 %v1969
    %2252 = vmatpush1.bf16.msra.mxu0 %v1968
    %2253 = vmatprep.subr.bf16.mxu0 %v1971
    %2254 = vmatpush1.bf16.msra.mxu0 %v1970
    %2255 = vmatprep.subr.bf16.mxu0 %v1973
    %2256 = vmatpush1.bf16.msra.mxu0 %v1972
    %2257 = vmatprep.subr.bf16.mxu0 %v1975
    %2258 = vmatpush1.bf16.msra.mxu0 %v1974
    %2259 = vmatprep.subr.bf16.mxu0 %v1977
    %2260 = vmatpush1.bf16.msra.mxu0 %v1976
    %2261 = vmatprep.subr.bf16.mxu0 %v1979
    %2262 = vmatpush1.bf16.msra.mxu0 %v1978
    %2263 = vmatprep.subr.bf16.mxu0 %v1981
    %2264 = vmatpush1.bf16.msra.mxu0 %v1980
    %2265 = vmatprep.subr.bf16.mxu0 %v1983
    %2266 = vmatpush1.bf16.msra.mxu0 %v1982
    %2267 = vmatprep.subr.bf16.mxu0 %v1985
    %2268 = vmatpush1.bf16.msra.mxu0 %v1984
    %2269 = vmatprep.subr.bf16.mxu0 %v1987
    %2270 = vmatpush1.bf16.msra.mxu0 %v1986
    %2271 = vmatprep.subr.bf16.mxu0 %v1989
    %2272 = vmatpush1.bf16.msra.mxu0 %v1988
    %2273 = vmatprep.subr.bf16.mxu0 %v1991
    %2274 = vmatpush1.bf16.msra.mxu0 %v1990
    %2275 = vmatprep.subr.bf16.mxu0 %v1993
    %2276 = vmatpush1.bf16.msra.mxu0 %v1992
    %2277 = vmatprep.subr.bf16.mxu0 %v1995
    %2278 = vmatpush1.bf16.msra.mxu0 %v1994
    %2279 = vmatprep.subr.bf16.mxu0 %v1997
    %2280 = vmatpush1.bf16.msra.mxu0 %v1996
    %2281 = vmatprep.mubr.bf16.mxu0 %v1345
    %2282 = vmatmul.mubr.bf16.gmra.mrb[0].mxu0 %v1344
    %v2283 = vpop.f32.mrb[0].mxu0
    %v2284 = vadd.f32 %v2243, %v2283
    %v2285 = vpop.f32.mrb[0].mxu0
    %v2286 = vadd.f32 %v2245, %v2285
    %v2287 = vpop.f32.mrb[0].mxu0
    %v2288 = vpop.f32.mrb[0].mxu0
    %2289 = vdwg.mxu0
    %v2290 = vmax.f32 %v2286, 0.0
    %v2291 = vand.u32 2147483647, %v2286
    %v2292 = vsub.f32 0.0, %v2291
    %v2293 = vmul.f32 %v2292, 1.442695
    %v2294 = vpow.pop %v2293
    %v2295 = vadd.f32 %v2294, 1.0
    %v2296 = vlog2.pop %v2295
    %v2297 = vmul.f32 %v2296, 0.6931472
    %v2298 = vmul.f32 -0.5, %v2294
    %v2299 = vadd.f32 %v2298, 1.0
    %v2300 = vmul.f32 %v2299, %v2294
    %v2301 = vand.u32 2147483647, %v2294
    %vm2302 = vcmp.lt.f32.partialorder %v2301, 0.0004427343
    %v2303 = vsel %vm2302, %v2300, %v2297
    %v2304 = vadd.f32 %v2290, %v2303
    %2305 = vst [vmem:[%s10] sm:$0xff] %v2284
    %v2306 = vadd.f32 %v2304, 1e-08
    %2307 = vst [vmem:[%s10 + $0x8] sm:$0xff] %v2306
    // Predicated region
    $region54: #{decoder_block_forward.1} parent=1 // pred_check
      _
    $region55: #{decoder_block_forward.1} parent=1 // pred_check_branch
      %2309 = sbr.rel (0) target = $region57
    $region56: #{decoder_block_forward.1} parent=1 // pred_region
      _
    $region57: #{decoder_block_forward.1} parent=1 // pred_fallthru
      _
    // Predicated region
    $region58: #{decoder_block_forward.1} parent=1 // pred_check
      _
    $region59: #{decoder_block_forward.1} parent=1 // pred_check_branch
      %2311 = sbr.rel (0) target = $region61
    $region60: #{decoder_block_forward.1} parent=1 // pred_region
      _
    $region61: #{decoder_block_forward.1} parent=1 // pred_fallthru
      _
    // Predicated region
    $region62: #{decoder_block_forward.1} parent=1 // pred_check
      _
    $region63: #{decoder_block_forward.1} parent=1 // pred_check_branch
      %2313 = sbr.rel (0) target = $region65
    $region64: #{decoder_block_forward.1} parent=1 // pred_region
      _
    $region65: #{decoder_block_forward.1} parent=1 // pred_fallthru
      _
    // Predicated region
    $region66: #{decoder_block_forward.1} parent=1 // pred_check
      _
    $region67: #{decoder_block_forward.1} parent=1 // pred_check_branch
      %2315 = sbr.rel (0) target = $region69
    $region68: #{decoder_block_forward.1} parent=1 // pred_region
      _
    $region69: #{decoder_block_forward.1} parent=1 // pred_fallthru
      _
    %2316 = vsyncpa [#allocation5], 1
    %2317 = vsyncpa [#allocation7], 1
    %2318 = vsyncpa [#allocation10], 1

</llo_original>
